<compile_context>
chip_gen: v7x
topology: tpu7x:2x2x1
jax: 0.10.0
libtpu: 0.0.40
codegen_flags: <defaults>
</compile_context>

<pallas_src>
import jax
import jax.numpy as jnp
from jax.experimental import pallas as pl
from jax.experimental.pallas import tpu as pltpu


def _global_dis_kernel(x_ref,
                       w1_ref, b1_ref,
                       w2_ref, b2_ref,
                       w3_ref, b3_ref,
                       w4_ref, b4_ref,
                       o_ref):
    """Fused 4-layer MLP for one (tile_b, 512) batch tile; weights live in VMEM."""
    # f32 tile streamed from HBM; cast to bf16 on the (mostly idle) VPU so the
    # MXU sees bf16 operands with f32 accumulation.
    x = x_ref[...].astype(jnp.bfloat16)                         # (TB, 512)

    # Layers 1-3: MXU matmul -> bias -> ReLU -> bf16, fused so each (TB, 256)
    # f32 intermediate is touched exactly once by the VPU.
    h = jnp.maximum(
        jnp.dot(x, w1_ref[...], preferred_element_type=jnp.float32) + b1_ref[...],
        0.0).astype(jnp.bfloat16)
    h = jnp.maximum(
        jnp.dot(h, w2_ref[...], preferred_element_type=jnp.float32) + b2_ref[...],
        0.0).astype(jnp.bfloat16)
    h = jnp.maximum(
        jnp.dot(h, w3_ref[...], preferred_element_type=jnp.float32) + b3_ref[...],
        0.0)                                                    # (TB, 256) f32

    # Layer 4: Linear(256, 1).  An N=1 MXU matmul would waste >99% of the
    # array, so do a VPU broadcast-multiply + XLU lane reduction instead.
    logit = jnp.sum(h * w4_ref[...], axis=-1, keepdims=True)    # (TB, 1) f32

    # Transpose FIRST (XLU, otherwise idle), then do bias + sigmoid on the
    # lane-dense (1, TB) row so the VALU/EUP touch ~TB/1024 vregs, not TB/8.
    o_ref[...] = jax.nn.sigmoid(jnp.transpose(logit) + b4_ref[...])   # (1, TB)


def _round_up(n, m):
    return ((n + m - 1) // m) * m


def _choose_tile_b(B, requested):
    """Tile size: multiple of 128, <= requested, and small enough that >= 2
    grid steps exist when B > 128 (balances v7x's two TensorCores)."""
    if B <= 128:
        return 128
    return max(128, min(requested, _round_up(pl.cdiv(B, 2), 128)))


def global_dis_forward(x, params, *, tile_b=1024):
    """x: (B, 512) float32 (or bf16). params: dict of transposed weights."""
    B, D_in = x.shape
    assert D_in == 512

    tile_b = _choose_tile_b(B, tile_b)
    assert tile_b % 128 == 0
    num_tiles = pl.cdiv(B, tile_b)
    B_pad = num_tiles * tile_b

    # bf16 weights for the MXU; biases and the 256->1 head stay f32.
    w1 = params["w1"].astype(jnp.bfloat16)     # (512, 256)
    w2 = params["w2"].astype(jnp.bfloat16)     # (256, 256)
    w3 = params["w3"].astype(jnp.bfloat16)     # (256, 256)
    b1, b2, b3 = params["b1"], params["b2"], params["b3"]      # (1, 256) f32
    w4, b4 = params["w4"], params["b4"]        # (1, 256), (1, 1) f32

    def _resident(arr):
        # Whole array in VMEM; constant index_map so the same block is reused
        # across every batch grid step (no per-step re-DMA of the weights).
        nd = arr.ndim
        return pl.BlockSpec(arr.shape, lambda i, _nd=nd: (0,) * _nd)

    # Explicit VMEM budget (x double-buffer + resident weights + f32
    # intermediates headroom), with 2x slack, clamped to stay well under
    # v7x's 64 MiB physical VMEM.
    x_item = jnp.dtype(x.dtype).itemsize
    vmem_bytes = (2 * tile_b * 512 * x_item                     # x tile x2 bufs
                  + 2 * 2 * (512 * 256 + 2 * 256 * 256)         # bf16 weights x2
                  + 2 * 4 * (4 * 256 + 2)                       # biases / head
                  + 4 * tile_b * 256 * 4                        # f32 intermediates
                  + 2 * tile_b * 4)                             # output row
    vmem_limit = int(min(50 << 20, max(32 << 20, 2 * vmem_bytes)))

    out_row = pl.pallas_call(
        _global_dis_kernel,
        out_shape=jax.ShapeDtypeStruct((1, B_pad), jnp.float32),
        grid_spec=pltpu.PrefetchScalarGridSpec(
            num_scalar_prefetch=0,
            grid=(num_tiles,),
            in_specs=[
                pl.BlockSpec((tile_b, 512), lambda i: (i, 0)),   # x batch tile
                _resident(w1), _resident(b1),
                _resident(w2), _resident(b2),
                _resident(w3), _resident(b3),
                _resident(w4), _resident(b4),
            ],
            # Tiles mapped along the lane axis of one (1, B_pad) row:
            # fully unmasked, lane-dense stores.
            out_specs=pl.BlockSpec((1, tile_b), lambda i: (0, i)),
        ),
        compiler_params=pltpu.CompilerParams(
            dimension_semantics=("parallel",),
            vmem_limit_bytes=vmem_limit),
    )(x, w1, b1, w2, b2, w3, b3, w4, b4)

    # (1, B_pad) -> (B, 1), dropping padded columns (which may hold garbage
    # from the out-of-bounds part of the last x block — rows are independent,
    # so valid outputs are unaffected).
    return out_row.reshape(B_pad, 1)[:B]


def init_params(key):
    """Deterministic init mimicking nn.Linear's U(-1/sqrt(fan_in), +1/sqrt(fan_in)).

    Weights stored as (in, out) = transpose of PyTorch's (out, in); the last
    layer's weight is kept as a (1, 256) row for the in-kernel lane reduction.
    """
    dims = [(512, 256), (256, 256), (256, 256), (256, 1)]
    params = {}
    keys = jax.random.split(key, 2 * len(dims))
    for idx, (fan_in, fan_out) in enumerate(dims):
        bound = 1.0 / (fan_in ** 0.5)
        w = jax.random.uniform(keys[2 * idx], (fan_in, fan_out),
                               minval=-bound, maxval=bound, dtype=jnp.float32)
        b = jax.random.uniform(keys[2 * idx + 1], (1, fan_out),
                               minval=-bound, maxval=bound, dtype=jnp.float32)
        if idx < 3:
            params[f"w{idx + 1}"] = w
            params[f"b{idx + 1}"] = b
        else:
            params["w4"] = w.T            # (1, 256)
            params["b4"] = b              # (1, 1)
    return params


def reference_forward(x, params):
    """Pure-JAX f32 reference matching the PyTorch module."""
    h = jnp.maximum(x @ params["w1"] + params["b1"], 0.0)
    h = jnp.maximum(h @ params["w2"] + params["b2"], 0.0)
    h = jnp.maximum(h @ params["w3"] + params["b3"], 0.0)
    logit = h @ params["w4"].T + params["b4"]
    return jax.nn.sigmoid(logit)


if __name__ == "__main__":
    key = jax.random.PRNGKey(0)
    k_param, k_x = jax.random.split(key)

    params = init_params(k_param)
    # B deliberately NOT a multiple of the tile: exercises the ragged-tail
    # (boundary-block) path and a 2-step "parallel" batch grid.
    B = 300
    x = jax.random.normal(k_x, (B, 512), dtype=jnp.float32)

    out = jax.block_until_ready(global_dis_forward(x, params))
    ref = reference_forward(x, params)

    assert out.shape == (B, 1)
    max_err = float(jnp.max(jnp.abs(out - ref)))
    # bf16 MXU operands vs f32 reference; sigmoid output errors stay << 2e-2.
    assert max_err < 2e-2, f"mismatch: max abs err {max_err}"

    print("KERNEL_OK")
</pallas_src>

<mosaic_0001>
module attributes {stable_mosaic.version = 11 : i64} {
  func.func @_global_dis_kernel(%arg0: i32, %arg1: memref<256x512xf32, #tpu.memory_space<vmem>>, %arg2: memref<512x256xbf16, #tpu.memory_space<vmem>>, %arg3: memref<1x256xf32, #tpu.memory_space<vmem>>, %arg4: memref<256x256xbf16, #tpu.memory_space<vmem>>, %arg5: memref<1x256xf32, #tpu.memory_space<vmem>>, %arg6: memref<256x256xbf16, #tpu.memory_space<vmem>>, %arg7: memref<1x256xf32, #tpu.memory_space<vmem>>, %arg8: memref<1x256xf32, #tpu.memory_space<vmem>>, %arg9: memref<1x1xf32, #tpu.memory_space<vmem>>, %arg10: memref<1x256xf32, #tpu.memory_space<vmem>>) attributes {dimension_semantics = [#tpu.dimension_semantics<parallel>], iteration_bounds = array<i64: 2>, scalar_prefetch = 0 : i64, scratch_operands = 0 : i64, tpu.core_type = #tpu.core_type<tc>, window_params = [{transform_indices = @transform_0, window_bounds = array<i64: 256, 512>}, {pipeline_mode = #tpu.pipeline_mode<synchronous>, transform_indices = @transform_1, window_bounds = array<i64: 512, 256>}, {pipeline_mode = #tpu.pipeline_mode<synchronous>, transform_indices = @transform_2, window_bounds = array<i64: 1, 256>}, {pipeline_mode = #tpu.pipeline_mode<synchronous>, transform_indices = @transform_3, window_bounds = array<i64: 256, 256>}, {pipeline_mode = #tpu.pipeline_mode<synchronous>, transform_indices = @transform_4, window_bounds = array<i64: 1, 256>}, {pipeline_mode = #tpu.pipeline_mode<synchronous>, transform_indices = @transform_5, window_bounds = array<i64: 256, 256>}, {pipeline_mode = #tpu.pipeline_mode<synchronous>, transform_indices = @transform_6, window_bounds = array<i64: 1, 256>}, {pipeline_mode = #tpu.pipeline_mode<synchronous>, transform_indices = @transform_7, window_bounds = array<i64: 1, 256>}, {pipeline_mode = #tpu.pipeline_mode<synchronous>, transform_indices = @transform_8, window_bounds = array<i64: 1, 1>}, {transform_indices = @transform_9, window_bounds = array<i64: 1, 256>}]} {
    %c0 = arith.constant 0 : index
    %c0_0 = arith.constant 0 : index
    %0 = vector.load %arg1[%c0, %c0_0] : memref<256x512xf32, #tpu.memory_space<vmem>>, vector<256x512xf32>
    %1 = arith.truncf %0 : vector<256x512xf32> to vector<256x512xbf16>
    %c0_1 = arith.constant 0 : index
    %c0_2 = arith.constant 0 : index
    %2 = vector.load %arg2[%c0_1, %c0_2] : memref<512x256xbf16, #tpu.memory_space<vmem>>, vector<512x256xbf16>
    %cst = arith.constant dense<0.000000e+00> : vector<256x256xf32>
    %3 = tpu.matmul %1, %2, %cst {dimension_numbers = #tpu.dot_dimension_numbers<[1], [0], [0], [1], [0, 0, 1, 1], [], []>} : vector<256x512xbf16>, vector<512x256xbf16>, vector<256x256xf32> -> vector<256x256xf32>
    %c0_3 = arith.constant 0 : index
    %c0_4 = arith.constant 0 : index
    %4 = vector.load %arg3[%c0_3, %c0_4] : memref<1x256xf32, #tpu.memory_space<vmem>>, vector<1x256xf32>
    %5 = vector.broadcast %4 : vector<1x256xf32> to vector<256x256xf32>
    %6 = arith.addf %3, %5 : vector<256x256xf32>
    %cst_5 = arith.constant 0.000000e+00 : f32
    %7 = vector.broadcast %cst_5 : f32 to vector<256x256xf32>
    %8 = arith.maximumf %6, %7 : vector<256x256xf32>
    %9 = arith.truncf %8 : vector<256x256xf32> to vector<256x256xbf16>
    %c0_6 = arith.constant 0 : index
    %c0_7 = arith.constant 0 : index
    %10 = vector.load %arg4[%c0_6, %c0_7] : memref<256x256xbf16, #tpu.memory_space<vmem>>, vector<256x256xbf16>
    %cst_8 = arith.constant dense<0.000000e+00> : vector<256x256xf32>
    %11 = tpu.matmul %9, %10, %cst_8 {dimension_numbers = #tpu.dot_dimension_numbers<[1], [0], [0], [1], [0, 0, 1, 1], [], []>} : vector<256x256xbf16>, vector<256x256xbf16>, vector<256x256xf32> -> vector<256x256xf32>
    %c0_9 = arith.constant 0 : index
    %c0_10 = arith.constant 0 : index
    %12 = vector.load %arg5[%c0_9, %c0_10] : memref<1x256xf32, #tpu.memory_space<vmem>>, vector<1x256xf32>
    %13 = vector.broadcast %12 : vector<1x256xf32> to vector<256x256xf32>
    %14 = arith.addf %11, %13 : vector<256x256xf32>
    %cst_11 = arith.constant 0.000000e+00 : f32
    %15 = vector.broadcast %cst_11 : f32 to vector<256x256xf32>
    %16 = arith.maximumf %14, %15 : vector<256x256xf32>
    %17 = arith.truncf %16 : vector<256x256xf32> to vector<256x256xbf16>
    %c0_12 = arith.constant 0 : index
    %c0_13 = arith.constant 0 : index
    %18 = vector.load %arg6[%c0_12, %c0_13] : memref<256x256xbf16, #tpu.memory_space<vmem>>, vector<256x256xbf16>
    %cst_14 = arith.constant dense<0.000000e+00> : vector<256x256xf32>
    %19 = tpu.matmul %17, %18, %cst_14 {dimension_numbers = #tpu.dot_dimension_numbers<[1], [0], [0], [1], [0, 0, 1, 1], [], []>} : vector<256x256xbf16>, vector<256x256xbf16>, vector<256x256xf32> -> vector<256x256xf32>
    %c0_15 = arith.constant 0 : index
    %c0_16 = arith.constant 0 : index
    %20 = vector.load %arg7[%c0_15, %c0_16] : memref<1x256xf32, #tpu.memory_space<vmem>>, vector<1x256xf32>
    %21 = vector.broadcast %20 : vector<1x256xf32> to vector<256x256xf32>
    %22 = arith.addf %19, %21 : vector<256x256xf32>
    %cst_17 = arith.constant 0.000000e+00 : f32
    %23 = vector.broadcast %cst_17 : f32 to vector<256x256xf32>
    %24 = arith.maximumf %22, %23 : vector<256x256xf32>
    %c0_18 = arith.constant 0 : index
    %c0_19 = arith.constant 0 : index
    %25 = vector.load %arg8[%c0_18, %c0_19] : memref<1x256xf32, #tpu.memory_space<vmem>>, vector<1x256xf32>
    %26 = vector.broadcast %25 : vector<1x256xf32> to vector<256x256xf32>
    %27 = arith.mulf %24, %26 : vector<256x256xf32>
    %cst_20 = arith.constant dense<0.000000e+00> : vector<256xf32>
    %28 = vector.multi_reduction <add>, %27, %cst_20 [1] : vector<256x256xf32> to vector<256xf32>
    %29 = vector.shape_cast %28 : vector<256xf32> to vector<256x1xf32>
    %30 = tpu.transpose %29, [1, 0] : vector<256x1xf32> -> vector<1x256xf32>
    %c0_21 = arith.constant 0 : index
    %c0_22 = arith.constant 0 : index
    %31 = vector.load %arg9[%c0_21, %c0_22] : memref<1x1xf32, #tpu.memory_space<vmem>>, vector<1x1xf32>
    %32 = vector.broadcast %31 : vector<1x1xf32> to vector<1x256xf32>
    %33 = arith.addf %30, %32 : vector<1x256xf32>
    %34 = arith.negf %33 : vector<1x256xf32>
    %35 = math.exp %34 : vector<1x256xf32>
    %cst_23 = arith.constant 1.000000e+00 : f32
    %36 = vector.broadcast %cst_23 : f32 to vector<1x256xf32>
    %37 = arith.addf %36, %35 : vector<1x256xf32>
    %38 = arith.divf %36, %37 : vector<1x256xf32>
    %c0_24 = arith.constant 0 : index
    %c0_25 = arith.constant 0 : index
    %39 = vector.load %arg10[%c0_24, %c0_25] : memref<1x256xf32, #tpu.memory_space<vmem>>, vector<1x256xf32>
    tpu.vector_store %arg10[%c0_24, %c0_25], %38 {strides = array<i32>} : memref<1x256xf32, #tpu.memory_space<vmem>>, vector<1x256xf32>,
    return
  }
  func.func @transform_0(%arg0: i32) -> (i32, i32) {
    %c0_i32 = arith.constant 0 : i32
    %c0_i32_0 = arith.constant 0 : i32
    return %arg0, %c0_i32 : i32, i32
  }
  func.func @transform_1(%arg0: i32) -> (i32, i32) {
    %c0_i32 = arith.constant 0 : i32
    %c0_i32_0 = arith.constant 0 : i32
    %c0_i32_1 = arith.constant 0 : i32
    return %c0_i32, %c0_i32_0 : i32, i32
  }
  func.func @transform_2(%arg0: i32) -> (i32, i32) {
    %c0_i32 = arith.constant 0 : i32
    %c0_i32_0 = arith.constant 0 : i32
    %c0_i32_1 = arith.constant 0 : i32
    return %c0_i32, %c0_i32_0 : i32, i32
  }
  func.func @transform_3(%arg0: i32) -> (i32, i32) {
    %c0_i32 = arith.constant 0 : i32
    %c0_i32_0 = arith.constant 0 : i32
    %c0_i32_1 = arith.constant 0 : i32
    return %c0_i32, %c0_i32_0 : i32, i32
  }
  func.func @transform_4(%arg0: i32) -> (i32, i32) {
    %c0_i32 = arith.constant 0 : i32
    %c0_i32_0 = arith.constant 0 : i32
    %c0_i32_1 = arith.constant 0 : i32
    return %c0_i32, %c0_i32_0 : i32, i32
  }
  func.func @transform_5(%arg0: i32) -> (i32, i32) {
    %c0_i32 = arith.constant 0 : i32
    %c0_i32_0 = arith.constant 0 : i32
    %c0_i32_1 = arith.constant 0 : i32
    return %c0_i32, %c0_i32_0 : i32, i32
  }
  func.func @transform_6(%arg0: i32) -> (i32, i32) {
    %c0_i32 = arith.constant 0 : i32
    %c0_i32_0 = arith.constant 0 : i32
    %c0_i32_1 = arith.constant 0 : i32
    return %c0_i32, %c0_i32_0 : i32, i32
  }
  func.func @transform_7(%arg0: i32) -> (i32, i32) {
    %c0_i32 = arith.constant 0 : i32
    %c0_i32_0 = arith.constant 0 : i32
    %c0_i32_1 = arith.constant 0 : i32
    return %c0_i32, %c0_i32_0 : i32, i32
  }
  func.func @transform_8(%arg0: i32) -> (i32, i32) {
    %c0_i32 = arith.constant 0 : i32
    %c0_i32_0 = arith.constant 0 : i32
    %c0_i32_1 = arith.constant 0 : i32
    return %c0_i32, %c0_i32_0 : i32, i32
  }
  func.func @transform_9(%arg0: i32) -> (i32, i32) {
    %c0_i32 = arith.constant 0 : i32
    %c0_i32_0 = arith.constant 0 : i32
    return %c0_i32, %arg0 : i32, i32
  }
}

</mosaic_0001>

<llo_original>
// kernel: tpu_custom_call.1
$region0: #{tpu_custom_call.1}
  #allocation0 [shape = 'u32[]', space=smem, size = 0x4, offset = 0x4, fixed_abs, tag = 'smem constant byte address 0x4 - core index']
  #allocation1 [shape = 'u32[144,128]{1,0:T(1,128)}', space=vmem, size = 0x12000, scoped, tag = 'internal scratch']
  #allocation2 [shape = 'f32[1,1]{1,0:T(1,128)S(1)}', space=vmem, size = 0x200, scoped, tag = 'scoped memory for tpu_custom_call.1']
  %s0 = inlined_call_operand.hbm [shape: f32[300,512], index: 0, kind: input, shape index: {}]
  %s1 = inlined_call_operand.hbm [shape: bf16[512,256], index: 1, kind: input, shape index: {}]
  %s2 = inlined_call_operand.vmem [shape: f32[1,256], index: 2, kind: input, shape index: {}]
  %s3 = inlined_call_operand.hbm [shape: bf16[256,256], index: 3, kind: input, shape index: {}]
  %s4 = inlined_call_operand.vmem [shape: f32[1,256], index: 4, kind: input, shape index: {}]
  %s5 = inlined_call_operand.hbm [shape: bf16[256,256], index: 5, kind: input, shape index: {}]
  %s6 = inlined_call_operand.vmem [shape: f32[1,256], index: 6, kind: input, shape index: {}]
  %s7 = inlined_call_operand.vmem [shape: f32[1,256], index: 7, kind: input, shape index: {}]
  %s8 = inlined_call_operand.<no memory space> [shape: f32[1,1], index: 8, kind: input, shape index: {}]
  %s9 = inlined_call_operand.hbm [shape: f32[1,512], index: 9, kind: output, shape index: {}]
  %s10 = sld [smem:[#allocation0]]
  $region85: #{tpu_custom_call.1} parent=0
    _
  %s12 = ssub.s32 1, %s10
  %s13 = scalar_select 0, %s12, %s10
  %v14 = vstv %s8
  %15 = vst [vmem:[#allocation2] sm:$0x1] %v14
  $region1: #{tpu_custom_call.1} parent=0
    #allocation3 [shape = 'u8[1048576]{0}', space=vmem, size = 0x100000, scoped, tag = 'input window, operand 0']
    #allocation4 [shape = 's32[2]{0}', space=sflag, size = 0x8, scoped, tag = 'scoped memory for tpu_custom_call.1']
    #allocation5 [shape = 's32[2]{0}', space=sflag, size = 0x8, scoped, tag = 'scoped memory for tpu_custom_call.1']
    #allocation6 [shape = 'u8[262144]{0}', space=vmem, size = 0x40000, scoped, tag = 'input window, operand 1, single buffered']
    #allocation7 [shape = 's32[1]{0}', space=sflag, size = 0x4, scoped, tag = 'scoped memory for tpu_custom_call.1']
    #allocation8 [shape = 'u8[131072]{0}', space=vmem, size = 0x20000, scoped, tag = 'input window, operand 3, single buffered']
    #allocation9 [shape = 'u8[131072]{0}', space=vmem, size = 0x20000, scoped, tag = 'input window, operand 5, single buffered']
    #allocation10 [shape = 's32[1]{0}', space=sflag, size = 0x4, scoped, tag = 'scoped memory for tpu_custom_call.1']
    #allocation11 [shape = 'u8[2048]{0}', space=vmem, size = 0x800, scoped, tag = 'output window, operand 0']
    %16 = vsyncpa [#allocation4], 0
    %s17 = scalar_lea.sflag [#allocation4], 1
    %18 = vsyncpa %s17, 0
    %19 = vsyncpa [#allocation7], 0
    %20 = vsyncpa [#allocation10], 0
    %21 = vsyncpa [#allocation5], 0
    %s22 = scalar_lea.sflag [#allocation5], 1
    %23 = vsyncpa %s22, 0
    loop: start=0, step=1, limit=4
    $region2: #{tpu_custom_call.1} parent=1 // loop_pre_header
      _
    $region3: #{tpu_custom_call.1} parent=1 // loop_header
      %s25 = sphi 0, %s29
      %p26 = scmp.ge.s32.totalorder %s25, 4
      %s35 = sphi 0, %s37
      %s38 = sphi 0, %s35
      %s39 = sphi 0, %s38
      %s55 = sphi 0, %s39
      %s59 = sphi 0, %s59
      %s61 = sphi 0, %s59
      %s62 = sphi 0, %s61
      %s76 = sphi 0, %s62
      %s80 = sphi 0, %s80
      %s82 = sphi 0, %s80
      %s83 = sphi 0, %s82
      %s97 = sphi 0, %s83
      %s101 = sphi 0, %s101
      %s103 = sphi 0, %s101
      %s104 = sphi 0, %s103
      %s118 = sphi 0, %s104
      %s122 = sphi 0, %s122
      %s124 = sphi 0, %s122
      %s125 = sphi 0, %s124
      %s139 = sphi 0, %s125
      %s143 = sphi 0, %s143
      %s145 = sphi 0, %s143
      %s146 = sphi 0, %s145
      %s160 = sphi 0, %s146
      %s164 = sphi 0, %s164
      %s166 = sphi 0, %s164
      %s167 = sphi 0, %s166
      %s181 = sphi 0, %s167
      %s185 = sphi 0, %s185
      %s187 = sphi 0, %s185
      %s188 = sphi 0, %s187
      %s202 = sphi 0, %s188
      %s206 = sphi 0, %s206
      %s208 = sphi 0, %s206
      %s209 = sphi 0, %s208
      %s223 = sphi 0, %s209
      %s229 = sphi 0, %s231
      %s232 = sphi 0, %s229
      %s233 = sphi 0, %s232
      %s249 = sphi 0, %s233
    $region4: #{tpu_custom_call.1} parent=1 // loop_header_branch
      %28 = sbr.rel (%p26) target = $region8
    $region5: #{tpu_custom_call.1} parent=1 // loop_body
      %s30 = ssub.s32 %s25, 1
      %s31 = ssub.s32 %s25, 2
      %s32 = sadd.s32 %s25, 1
      %s33 = ssub.s32 %s25, %s32
      %p34 = scmp.eq.s32.totalorder %s33, 0
      %s36 = sadd.s32 %s35, 1
      %s37 = scalar_select %p34, %s35, %s36
      %p40 = pneg %p34
      %p41 = scmp.eq.s32.totalorder %s25, 1
      %p42 = por %p40, %p41
      %p43 = scmp.ne.s32.totalorder %s35, %s38
      %p44 = scmp.eq.s32.totalorder %s25, 0
      %p45 = por %p43, %p44
      %p46 = scmp.ne.s32.totalorder %s35, %s38
      %p47 = scmp.eq.s32.totalorder %s30, 1
      %p48 = por %p46, %p47
      %p49 = scmp.ne.s32.totalorder %s38, %s39
      %p50 = scmp.eq.s32.totalorder %s30, 0
      %p51 = por %p49, %p50
      %p52 = scmp.ne.s32.totalorder %s38, %s39
      %p53 = scmp.eq.s32.totalorder %s31, 1
      %p54 = por %p52, %p53
      %p56 = scmp.ne.s32.totalorder %s39, %s55
      %p57 = scmp.eq.s32.totalorder %s31, 0
      %p58 = por %p56, %p57
      %s60 = sadd.s32 %s59, 1
      %p63 = scmp.eq.s32.totalorder %s25, 1
      %p64 = scmp.ne.s32.totalorder %s59, %s61
      %p65 = scmp.eq.s32.totalorder %s25, 0
      %p66 = por %p64, %p65
      %p67 = scmp.ne.s32.totalorder %s59, %s61
      %p68 = scmp.eq.s32.totalorder %s30, 1
      %p69 = por %p67, %p68
      %p70 = scmp.ne.s32.totalorder %s61, %s62
      %p71 = scmp.eq.s32.totalorder %s30, 0
      %p72 = por %p70, %p71
      %p73 = scmp.ne.s32.totalorder %s61, %s62
      %p74 = scmp.eq.s32.totalorder %s31, 1
      %p75 = por %p73, %p74
      %p77 = scmp.ne.s32.totalorder %s62, %s76
      %p78 = scmp.eq.s32.totalorder %s31, 0
      %p79 = por %p77, %p78
      %s81 = sadd.s32 %s80, 1
      %p84 = scmp.eq.s32.totalorder %s25, 1
      %p85 = scmp.ne.s32.totalorder %s80, %s82
      %p86 = scmp.eq.s32.totalorder %s25, 0
      %p87 = por %p85, %p86
      %p88 = scmp.ne.s32.totalorder %s80, %s82
      %p89 = scmp.eq.s32.totalorder %s30, 1
      %p90 = por %p88, %p89
      %p91 = scmp.ne.s32.totalorder %s82, %s83
      %p92 = scmp.eq.s32.totalorder %s30, 0
      %p93 = por %p91, %p92
      %p94 = scmp.ne.s32.totalorder %s82, %s83
      %p95 = scmp.eq.s32.totalorder %s31, 1
      %p96 = por %p94, %p95
      %p98 = scmp.ne.s32.totalorder %s83, %s97
      %p99 = scmp.eq.s32.totalorder %s31, 0
      %p100 = por %p98, %p99
      %s102 = sadd.s32 %s101, 1
      %p105 = scmp.eq.s32.totalorder %s25, 1
      %p106 = scmp.ne.s32.totalorder %s101, %s103
      %p107 = scmp.eq.s32.totalorder %s25, 0
      %p108 = por %p106, %p107
      %p109 = scmp.ne.s32.totalorder %s101, %s103
      %p110 = scmp.eq.s32.totalorder %s30, 1
      %p111 = por %p109, %p110
      %p112 = scmp.ne.s32.totalorder %s103, %s104
      %p113 = scmp.eq.s32.totalorder %s30, 0
      %p114 = por %p112, %p113
      %p115 = scmp.ne.s32.totalorder %s103, %s104
      %p116 = scmp.eq.s32.totalorder %s31, 1
      %p117 = por %p115, %p116
      %p119 = scmp.ne.s32.totalorder %s104, %s118
      %p120 = scmp.eq.s32.totalorder %s31, 0
      %p121 = por %p119, %p120
      %s123 = sadd.s32 %s122, 1
      %p126 = scmp.eq.s32.totalorder %s25, 1
      %p127 = scmp.ne.s32.totalorder %s122, %s124
      %p128 = scmp.eq.s32.totalorder %s25, 0
      %p129 = por %p127, %p128
      %p130 = scmp.ne.s32.totalorder %s122, %s124
      %p131 = scmp.eq.s32.totalorder %s30, 1
      %p132 = por %p130, %p131
      %p133 = scmp.ne.s32.totalorder %s124, %s125
      %p134 = scmp.eq.s32.totalorder %s30, 0
      %p135 = por %p133, %p134
      %p136 = scmp.ne.s32.totalorder %s124, %s125
      %p137 = scmp.eq.s32.totalorder %s31, 1
      %p138 = por %p136, %p137
      %p140 = scmp.ne.s32.totalorder %s125, %s139
      %p141 = scmp.eq.s32.totalorder %s31, 0
      %p142 = por %p140, %p141
      %s144 = sadd.s32 %s143, 1
      %p147 = scmp.eq.s32.totalorder %s25, 1
      %p148 = scmp.ne.s32.totalorder %s143, %s145
      %p149 = scmp.eq.s32.totalorder %s25, 0
      %p150 = por %p148, %p149
      %p151 = scmp.ne.s32.totalorder %s143, %s145
      %p152 = scmp.eq.s32.totalorder %s30, 1
      %p153 = por %p151, %p152
      %p154 = scmp.ne.s32.totalorder %s145, %s146
      %p155 = scmp.eq.s32.totalorder %s30, 0
      %p156 = por %p154, %p155
      %p157 = scmp.ne.s32.totalorder %s145, %s146
      %p158 = scmp.eq.s32.totalorder %s31, 1
      %p159 = por %p157, %p158
      %p161 = scmp.ne.s32.totalorder %s146, %s160
      %p162 = scmp.eq.s32.totalorder %s31, 0
      %p163 = por %p161, %p162
      %s165 = sadd.s32 %s164, 1
      %p168 = scmp.eq.s32.totalorder %s25, 1
      %p169 = scmp.ne.s32.totalorder %s164, %s166
      %p170 = scmp.eq.s32.totalorder %s25, 0
      %p171 = por %p169, %p170
      %p172 = scmp.ne.s32.totalorder %s164, %s166
      %p173 = scmp.eq.s32.totalorder %s30, 1
      %p174 = por %p172, %p173
      %p175 = scmp.ne.s32.totalorder %s166, %s167
      %p176 = scmp.eq.s32.totalorder %s30, 0
      %p177 = por %p175, %p176
      %p178 = scmp.ne.s32.totalorder %s166, %s167
      %p179 = scmp.eq.s32.totalorder %s31, 1
      %p180 = por %p178, %p179
      %p182 = scmp.ne.s32.totalorder %s167, %s181
      %p183 = scmp.eq.s32.totalorder %s31, 0
      %p184 = por %p182, %p183
      %s186 = sadd.s32 %s185, 1
      %p189 = scmp.eq.s32.totalorder %s25, 1
      %p190 = scmp.ne.s32.totalorder %s185, %s187
      %p191 = scmp.eq.s32.totalorder %s25, 0
      %p192 = por %p190, %p191
      %p193 = scmp.ne.s32.totalorder %s185, %s187
      %p194 = scmp.eq.s32.totalorder %s30, 1
      %p195 = por %p193, %p194
      %p196 = scmp.ne.s32.totalorder %s187, %s188
      %p197 = scmp.eq.s32.totalorder %s30, 0
      %p198 = por %p196, %p197
      %p199 = scmp.ne.s32.totalorder %s187, %s188
      %p200 = scmp.eq.s32.totalorder %s31, 1
      %p201 = por %p199, %p200
      %p203 = scmp.ne.s32.totalorder %s188, %s202
      %p204 = scmp.eq.s32.totalorder %s31, 0
      %p205 = por %p203, %p204
      %s207 = sadd.s32 %s206, 1
      %p210 = scmp.eq.s32.totalorder %s25, 1
      %p211 = scmp.ne.s32.totalorder %s206, %s208
      %p212 = scmp.eq.s32.totalorder %s25, 0
      %p213 = por %p211, %p212
      %p214 = scmp.ne.s32.totalorder %s206, %s208
      %p215 = scmp.eq.s32.totalorder %s30, 1
      %p216 = por %p214, %p215
      %p217 = scmp.ne.s32.totalorder %s208, %s209
      %p218 = scmp.eq.s32.totalorder %s30, 0
      %p219 = por %p217, %p218
      %p220 = scmp.ne.s32.totalorder %s208, %s209
      %p221 = scmp.eq.s32.totalorder %s31, 1
      %p222 = por %p220, %p221
      %p224 = scmp.ne.s32.totalorder %s209, %s223
      %p225 = scmp.eq.s32.totalorder %s31, 0
      %p226 = por %p224, %p225
      %s227 = ssub.s32 %s25, %s32
      %p228 = scmp.eq.s32.totalorder %s227, 0
      %s230 = sadd.s32 %s229, 1
      %s231 = scalar_select %p228, %s229, %s230
      %p234 = pneg %p228
      %p235 = scmp.eq.s32.totalorder %s25, 1
      %p236 = por %p234, %p235
      %p237 = scmp.ne.s32.totalorder %s229, %s232
      %p238 = scmp.eq.s32.totalorder %s25, 0
      %p239 = por %p237, %p238
      %p240 = scmp.ne.s32.totalorder %s229, %s232
      %p241 = scmp.eq.s32.totalorder %s30, 1
      %p242 = por %p240, %p241
      %p243 = scmp.ne.s32.totalorder %s232, %s233
      %p244 = scmp.eq.s32.totalorder %s30, 0
      %p245 = por %p243, %p244
      %p246 = scmp.ne.s32.totalorder %s232, %s233
      %p247 = scmp.eq.s32.totalorder %s31, 1
      %p248 = por %p246, %p247
      %p250 = scmp.ne.s32.totalorder %s233, %s249
      %p251 = scmp.eq.s32.totalorder %s31, 0
      %p252 = por %p250, %p251
      %p253 = scmp.le.s32.totalorder 1, %s25
      %p254 = scmp.lt.s32.totalorder %s25, 3
      %p255 = pnand %p253, %p254
      %p256 = pneg %p255
      // Predicated region
      $region9: #{tpu_custom_call.1} parent=5 // pred_check
        _
      $region10: #{tpu_custom_call.1} parent=5 // pred_check_branch
        %258 = sbr.rel (%p255) target = $region12
      $region11: #{tpu_custom_call.1} parent=5 // pred_region
        %s259 = ssub.s32 %s25, 1
        // Predicated region
        $region13: #{tpu_custom_call.1} parent=11 // pred_check
          %p260 = pneg %p72
        $region14: #{tpu_custom_call.1} parent=11 // pred_check_branch
          %262 = sbr.rel (%p260) target = $region16
        $region15: #{tpu_custom_call.1} parent=11 // pred_region
          %s264 = ssub.s32 8192, 8192
          %265 = vsyncadd [#allocation7], %s264
          %s266 = sshll.u32 [#allocation6], 4
          %s267 = int_to_ptr.vmem [resolvable:$true] %s266
          %272 = dma.hbm_to_vmem [thread:$0]  %s1, 8192, %s267, [#allocation7], 128, 128, 8
        $region16: #{tpu_custom_call.1} parent=11 // pred_fallthru
          _
        // Predicated region
        $region17: #{tpu_custom_call.1} parent=11 // pred_check
          %p273 = pneg %p93
        $region18: #{tpu_custom_call.1} parent=11 // pred_check_branch
          %275 = sbr.rel (%p273) target = $region20
        $region19: #{tpu_custom_call.1} parent=11 // pred_region
          _
        $region20: #{tpu_custom_call.1} parent=11 // pred_fallthru
          _
        // Predicated region
        $region21: #{tpu_custom_call.1} parent=11 // pred_check
          %p276 = pneg %p114
        $region22: #{tpu_custom_call.1} parent=11 // pred_check_branch
          %278 = sbr.rel (%p276) target = $region24
        $region23: #{tpu_custom_call.1} parent=11 // pred_region
          %s280 = ssub.s32 4096, 4096
          %281 = vsyncadd [#allocation7], %s280
          %s282 = sshll.u32 [#allocation8], 4
          %s283 = int_to_ptr.vmem [resolvable:$true] %s282
          %288 = dma.hbm_to_vmem [thread:$0]  %s3, 4096, %s283, [#allocation7], 128, 128, 8
        $region24: #{tpu_custom_call.1} parent=11 // pred_fallthru
          _
        // Predicated region
        $region25: #{tpu_custom_call.1} parent=11 // pred_check
          %p289 = pneg %p135
        $region26: #{tpu_custom_call.1} parent=11 // pred_check_branch
          %291 = sbr.rel (%p289) target = $region28
        $region27: #{tpu_custom_call.1} parent=11 // pred_region
          _
        $region28: #{tpu_custom_call.1} parent=11 // pred_fallthru
          _
        // Predicated region
        $region29: #{tpu_custom_call.1} parent=11 // pred_check
          %p292 = pneg %p156
        $region30: #{tpu_custom_call.1} parent=11 // pred_check_branch
          %294 = sbr.rel (%p292) target = $region32
        $region31: #{tpu_custom_call.1} parent=11 // pred_region
          %s296 = ssub.s32 4096, 4096
          %297 = vsyncadd [#allocation10], %s296
          %s298 = sshll.u32 [#allocation9], 4
          %s299 = int_to_ptr.vmem [resolvable:$true] %s298
          %304 = dma.hbm_to_vmem [thread:$0]  %s5, 4096, %s299, [#allocation10], 128, 128, 8
        $region32: #{tpu_custom_call.1} parent=11 // pred_fallthru
          _
        // Predicated region
        $region33: #{tpu_custom_call.1} parent=11 // pred_check
          %p305 = pneg %p177
        $region34: #{tpu_custom_call.1} parent=11 // pred_check_branch
          %307 = sbr.rel (%p305) target = $region36
        $region35: #{tpu_custom_call.1} parent=11 // pred_region
          _
        $region36: #{tpu_custom_call.1} parent=11 // pred_fallthru
          _
        // Predicated region
        $region37: #{tpu_custom_call.1} parent=11 // pred_check
          %p308 = pneg %p198
        $region38: #{tpu_custom_call.1} parent=11 // pred_check_branch
          %310 = sbr.rel (%p308) target = $region40
        $region39: #{tpu_custom_call.1} parent=11 // pred_region
          _
        $region40: #{tpu_custom_call.1} parent=11 // pred_fallthru
          _
        // Predicated region
        $region41: #{tpu_custom_call.1} parent=11 // pred_check
          %p311 = pneg %p219
        $region42: #{tpu_custom_call.1} parent=11 // pred_check_branch
          %313 = sbr.rel (%p311) target = $region44
        $region43: #{tpu_custom_call.1} parent=11 // pred_region
          _
        $region44: #{tpu_custom_call.1} parent=11 // pred_fallthru
          _
      $region12: #{tpu_custom_call.1} parent=5 // pred_fallthru
        _
      %p314 = scmp.lt.s32.totalorder %s25, 2
      // Predicated region
      $region45: #{tpu_custom_call.1} parent=5 // pred_check
        %p315 = pneg %p314
      $region46: #{tpu_custom_call.1} parent=5 // pred_check_branch
        %317 = sbr.rel (%p315) target = $region48
      $region47: #{tpu_custom_call.1} parent=5 // pred_region
        // Predicated region
        $region49: #{tpu_custom_call.1} parent=47 // pred_check
          %p318 = pneg %p45
        $region50: #{tpu_custom_call.1} parent=47 // pred_check_branch
          %320 = sbr.rel (%p318) target = $region52
        $region51: #{tpu_custom_call.1} parent=47 // pred_region
          %s321 = sand.u32 %s35, 1
          %s322 = scalar_lea.sflag [#allocation4], %s321
          %s323 = sand.u32 %s35, 1
          %s324 = smul.addr %s323, 1024
          %s325 = scalar_lea.vmem [#allocation3], %s324
          %s326 = smul.u32 32, %s25
          %s327 = ssub.s32 38, %s326
          %p328 = scmp.lt.s32.totalorder %s327, 32
          %s329 = scalar_select %p328, %s327, 32
          %s330 = smul.u32 128, %s329
          %s331 = smul.u32 %s330, 4
          %s333 = ssub.s32 16384, %s331
          %334 = vsyncadd %s322, %s333
          %p335 = scmp.ne.s32.totalorder 0, %s331
          %s336 = smul.addr %s326, 4
          %s337 = smul.addr %s336, 128
          %s338 = scalar_lea.hbm %s0, %s337
          %s339 = smul.u32 32, %s329
          %s340 = sshll.u32 %s325, 4
          %s341 = int_to_ptr.vmem [resolvable:$true] %s340
          %s342 = sshll.u32 %s339, 4
          %346 = dma.hbm_to_vmem [thread:$0]  (%p335), %s338, %s342, %s341, %s322, 512, 512, 32
        $region52: #{tpu_custom_call.1} parent=47 // pred_fallthru
          _
      $region48: #{tpu_custom_call.1} parent=5 // pred_fallthru
        _
      %p347 = scmp.le.s32.totalorder 1, %s25
      %p348 = scmp.lt.s32.totalorder %s25, 3
      %p349 = pnand %p347, %p348
      %p350 = pneg %p349
      // Predicated region
      $region53: #{tpu_custom_call.1} parent=5 // pred_check
        _
      $region54: #{tpu_custom_call.1} parent=5 // pred_check_branch
        %352 = sbr.rel (%p349) target = $region56
      $region55: #{tpu_custom_call.1} parent=5 // pred_region
        %s353 = ssub.s32 %s25, 1
        %s354 = sand.u32 %s38, 1
        %s355 = scalar_lea.sflag [#allocation4], %s354
        %s356 = sand.u32 %s38, 1
        %s357 = smul.addr %s356, 1024
        %s358 = scalar_lea.vmem [#allocation3], %s357
        // Predicated region
        $region57: #{tpu_custom_call.1} parent=55 // pred_check
          %p359 = pneg %p51
        $region58: #{tpu_custom_call.1} parent=55 // pred_check_branch
          %361 = sbr.rel (%p359) target = $region60
        $region59: #{tpu_custom_call.1} parent=55 // pred_region
          %362 = dma.done %s355, 16384
        $region60: #{tpu_custom_call.1} parent=55 // pred_fallthru
          _
        // Predicated region
        $region61: #{tpu_custom_call.1} parent=55 // pred_check
          %p363 = pneg %p72
        $region62: #{tpu_custom_call.1} parent=55 // pred_check_branch
          %365 = sbr.rel (%p363) target = $region64
        $region63: #{tpu_custom_call.1} parent=55 // pred_region
          %366 = dma.done [#allocation7], 8192
        $region64: #{tpu_custom_call.1} parent=55 // pred_fallthru
          _
        // Predicated region
        $region65: #{tpu_custom_call.1} parent=55 // pred_check
          %p367 = pneg %p114
        $region66: #{tpu_custom_call.1} parent=55 // pred_check_branch
          %369 = sbr.rel (%p367) target = $region68
        $region67: #{tpu_custom_call.1} parent=55 // pred_region
          %370 = dma.done [#allocation7], 4096
        $region68: #{tpu_custom_call.1} parent=55 // pred_fallthru
          _
        // Predicated region
        $region69: #{tpu_custom_call.1} parent=55 // pred_check
          %p371 = pneg %p156
        $region70: #{tpu_custom_call.1} parent=55 // pred_check_branch
          %373 = sbr.rel (%p371) target = $region72
        $region71: #{tpu_custom_call.1} parent=55 // pred_region
          %374 = dma.done [#allocation10], 4096
        $region72: #{tpu_custom_call.1} parent=55 // pred_fallthru
          _
        %s375 = sand.u32 %s38, 1
        %s376 = scalar_lea.sflag [#allocation4], %s375
        %s377 = sand.u32 %s38, 1
        %s378 = smul.addr %s377, 1024
        %s379 = scalar_lea.vmem [#allocation3], %s378
        %p380 = pneg %p51
        %p381 = pneg %p48
        %p382 = pneg %p72
        %p383 = pneg %p69
        %p384 = pneg %p93
        %p385 = pneg %p90
        %p386 = pneg %p114
        %p387 = pneg %p111
        %p388 = pneg %p135
        %p389 = pneg %p132
        %p390 = pneg %p156
        %p391 = pneg %p153
        %p392 = pneg %p177
        %p393 = pneg %p174
        %p394 = pneg %p198
        %p395 = pneg %p195
        %p396 = pneg %p219
        %p397 = pneg %p216
        %p398 = pneg %p245
        %p399 = pneg %p242
        %s400 = sand.u32 %s232, 1
        %s401 = scalar_lea.sflag [#allocation5], %s400
        %s402 = sand.u32 %s232, 1
        %s403 = smul.addr %s402, 2
        %s404 = scalar_lea.vmem [#allocation11], %s403
        %s405 = smul.u32 32, %s30
        %s406 = ssub.s32 38, %s405
        %p407 = scmp.lt.s32.totalorder %s406, 32
        %s408 = scalar_select %p407, %s406, 32
        %s409 = smul.u32 128, %s408
        %s410 = smul.u32 %s409, 4
        %s411 = smul.u32 2, %s30
        %v412 = vld [vmem:[%s358] sm:$0xff]
        %v413 = vld [vmem:[%s358 + $0x8] sm:$0xff]
        %v414 = vld [vmem:[%s358 + $0x10] sm:$0xff]
        %v415 = vld [vmem:[%s358 + $0x18] sm:$0xff]
        %v416 = vld [vmem:[%s358 + $0x20] sm:$0xff]
        %v417 = vld [vmem:[%s358 + $0x28] sm:$0xff]
        %v418 = vld [vmem:[%s358 + $0x30] sm:$0xff]
        %v419 = vld [vmem:[%s358 + $0x38] sm:$0xff]
        %v420 = vld [vmem:[%s358 + $0x40] sm:$0xff]
        %v421 = vld [vmem:[%s358 + $0x48] sm:$0xff]
        %v422 = vld [vmem:[%s358 + $0x50] sm:$0xff]
        %v423 = vld [vmem:[%s358 + $0x58] sm:$0xff]
        %v424 = vld [vmem:[%s358 + $0x60] sm:$0xff]
        %v425 = vld [vmem:[%s358 + $0x68] sm:$0xff]
        %v426 = vld [vmem:[%s358 + $0x70] sm:$0xff]
        %v427 = vld [vmem:[%s358 + $0x78] sm:$0xff]
        %v428 = vld [vmem:[%s358 + $0x80] sm:$0xff]
        %v429 = vld [vmem:[%s358 + $0x88] sm:$0xff]
        %v430 = vld [vmem:[%s358 + $0x90] sm:$0xff]
        %v431 = vld [vmem:[%s358 + $0x98] sm:$0xff]
        %v432 = vld [vmem:[%s358 + $0xa0] sm:$0xff]
        %v433 = vld [vmem:[%s358 + $0xa8] sm:$0xff]
        %v434 = vld [vmem:[%s358 + $0xb0] sm:$0xff]
        %v435 = vld [vmem:[%s358 + $0xb8] sm:$0xff]
        %v436 = vld [vmem:[%s358 + $0xc0] sm:$0xff]
        %v437 = vld [vmem:[%s358 + $0xc8] sm:$0xff]
        %v438 = vld [vmem:[%s358 + $0xd0] sm:$0xff]
        %v439 = vld [vmem:[%s358 + $0xd8] sm:$0xff]
        %v440 = vld [vmem:[%s358 + $0xe0] sm:$0xff]
        %v441 = vld [vmem:[%s358 + $0xe8] sm:$0xff]
        %v442 = vld [vmem:[%s358 + $0xf0] sm:$0xff]
        %v443 = vld [vmem:[%s358 + $0xf8] sm:$0xff]
        %v444 = vld [vmem:[%s358 + $0x100] sm:$0xff]
        %v445 = vld [vmem:[%s358 + $0x108] sm:$0xff]
        %v446 = vld [vmem:[%s358 + $0x110] sm:$0xff]
        %v447 = vld [vmem:[%s358 + $0x118] sm:$0xff]
        %v448 = vld [vmem:[%s358 + $0x120] sm:$0xff]
        %v449 = vld [vmem:[%s358 + $0x128] sm:$0xff]
        %v450 = vld [vmem:[%s358 + $0x130] sm:$0xff]
        %v451 = vld [vmem:[%s358 + $0x138] sm:$0xff]
        %v452 = vld [vmem:[%s358 + $0x140] sm:$0xff]
        %v453 = vld [vmem:[%s358 + $0x148] sm:$0xff]
        %v454 = vld [vmem:[%s358 + $0x150] sm:$0xff]
        %v455 = vld [vmem:[%s358 + $0x158] sm:$0xff]
        %v456 = vld [vmem:[%s358 + $0x160] sm:$0xff]
        %v457 = vld [vmem:[%s358 + $0x168] sm:$0xff]
        %v458 = vld [vmem:[%s358 + $0x170] sm:$0xff]
        %v459 = vld [vmem:[%s358 + $0x178] sm:$0xff]
        %v460 = vld [vmem:[%s358 + $0x180] sm:$0xff]
        %v461 = vld [vmem:[%s358 + $0x188] sm:$0xff]
        %v462 = vld [vmem:[%s358 + $0x190] sm:$0xff]
        %v463 = vld [vmem:[%s358 + $0x198] sm:$0xff]
        %v464 = vld [vmem:[%s358 + $0x1a0] sm:$0xff]
        %v465 = vld [vmem:[%s358 + $0x1a8] sm:$0xff]
        %v466 = vld [vmem:[%s358 + $0x1b0] sm:$0xff]
        %v467 = vld [vmem:[%s358 + $0x1b8] sm:$0xff]
        %v468 = vld [vmem:[%s358 + $0x1c0] sm:$0xff]
        %v469 = vld [vmem:[%s358 + $0x1c8] sm:$0xff]
        %v470 = vld [vmem:[%s358 + $0x1d0] sm:$0xff]
        %v471 = vld [vmem:[%s358 + $0x1d8] sm:$0xff]
        %v472 = vld [vmem:[%s358 + $0x1e0] sm:$0xff]
        %v473 = vld [vmem:[%s358 + $0x1e8] sm:$0xff]
        %v474 = vld [vmem:[%s358 + $0x1f0] sm:$0xff]
        %v475 = vld [vmem:[%s358 + $0x1f8] sm:$0xff]
        %v476 = vld [vmem:[%s358 + $0x200] sm:$0xff]
        %v477 = vld [vmem:[%s358 + $0x208] sm:$0xff]
        %v478 = vld [vmem:[%s358 + $0x210] sm:$0xff]
        %v479 = vld [vmem:[%s358 + $0x218] sm:$0xff]
        %v480 = vld [vmem:[%s358 + $0x220] sm:$0xff]
        %v481 = vld [vmem:[%s358 + $0x228] sm:$0xff]
        %v482 = vld [vmem:[%s358 + $0x230] sm:$0xff]
        %v483 = vld [vmem:[%s358 + $0x238] sm:$0xff]
        %v484 = vld [vmem:[%s358 + $0x240] sm:$0xff]
        %v485 = vld [vmem:[%s358 + $0x248] sm:$0xff]
        %v486 = vld [vmem:[%s358 + $0x250] sm:$0xff]
        %v487 = vld [vmem:[%s358 + $0x258] sm:$0xff]
        %v488 = vld [vmem:[%s358 + $0x260] sm:$0xff]
        %v489 = vld [vmem:[%s358 + $0x268] sm:$0xff]
        %v490 = vld [vmem:[%s358 + $0x270] sm:$0xff]
        %v491 = vld [vmem:[%s358 + $0x278] sm:$0xff]
        %v492 = vld [vmem:[%s358 + $0x280] sm:$0xff]
        %v493 = vld [vmem:[%s358 + $0x288] sm:$0xff]
        %v494 = vld [vmem:[%s358 + $0x290] sm:$0xff]
        %v495 = vld [vmem:[%s358 + $0x298] sm:$0xff]
        %v496 = vld [vmem:[%s358 + $0x2a0] sm:$0xff]
        %v497 = vld [vmem:[%s358 + $0x2a8] sm:$0xff]
        %v498 = vld [vmem:[%s358 + $0x2b0] sm:$0xff]
        %v499 = vld [vmem:[%s358 + $0x2b8] sm:$0xff]
        %v500 = vld [vmem:[%s358 + $0x2c0] sm:$0xff]
        %v501 = vld [vmem:[%s358 + $0x2c8] sm:$0xff]
        %v502 = vld [vmem:[%s358 + $0x2d0] sm:$0xff]
        %v503 = vld [vmem:[%s358 + $0x2d8] sm:$0xff]
        %v504 = vld [vmem:[%s358 + $0x2e0] sm:$0xff]
        %v505 = vld [vmem:[%s358 + $0x2e8] sm:$0xff]
        %v506 = vld [vmem:[%s358 + $0x2f0] sm:$0xff]
        %v507 = vld [vmem:[%s358 + $0x2f8] sm:$0xff]
        %v508 = vld [vmem:[%s358 + $0x300] sm:$0xff]
        %v509 = vld [vmem:[%s358 + $0x308] sm:$0xff]
        %v510 = vld [vmem:[%s358 + $0x310] sm:$0xff]
        %v511 = vld [vmem:[%s358 + $0x318] sm:$0xff]
        %v512 = vld [vmem:[%s358 + $0x320] sm:$0xff]
        %v513 = vld [vmem:[%s358 + $0x328] sm:$0xff]
        %v514 = vld [vmem:[%s358 + $0x330] sm:$0xff]
        %v515 = vld [vmem:[%s358 + $0x338] sm:$0xff]
        %v516 = vld [vmem:[%s358 + $0x340] sm:$0xff]
        %v517 = vld [vmem:[%s358 + $0x348] sm:$0xff]
        %v518 = vld [vmem:[%s358 + $0x350] sm:$0xff]
        %v519 = vld [vmem:[%s358 + $0x358] sm:$0xff]
        %v520 = vld [vmem:[%s358 + $0x360] sm:$0xff]
        %v521 = vld [vmem:[%s358 + $0x368] sm:$0xff]
        %v522 = vld [vmem:[%s358 + $0x370] sm:$0xff]
        %v523 = vld [vmem:[%s358 + $0x378] sm:$0xff]
        %v524 = vld [vmem:[%s358 + $0x380] sm:$0xff]
        %v525 = vld [vmem:[%s358 + $0x388] sm:$0xff]
        %v526 = vld [vmem:[%s358 + $0x390] sm:$0xff]
        %v527 = vld [vmem:[%s358 + $0x398] sm:$0xff]
        %v528 = vld [vmem:[%s358 + $0x3a0] sm:$0xff]
        %v529 = vld [vmem:[%s358 + $0x3a8] sm:$0xff]
        %v530 = vld [vmem:[%s358 + $0x3b0] sm:$0xff]
        %v531 = vld [vmem:[%s358 + $0x3b8] sm:$0xff]
        %v532 = vld [vmem:[%s358 + $0x3c0] sm:$0xff]
        %v533 = vld [vmem:[%s358 + $0x3c8] sm:$0xff]
        %v534 = vld [vmem:[%s358 + $0x3d0] sm:$0xff]
        %v535 = vld [vmem:[%s358 + $0x3d8] sm:$0xff]
        %v536 = vld [vmem:[%s358 + $0x3e0] sm:$0xff]
        %v537 = vld [vmem:[%s358 + $0x3e8] sm:$0xff]
        %v538 = vld [vmem:[%s358 + $0x3f0] sm:$0xff]
        %v539 = vld [vmem:[%s358 + $0x3f8] sm:$0xff]
        %v540 = vpack.c.bf16 %v416, %v412
        %v541 = vpack.c.bf16 %v417, %v413
        %v542 = vpack.c.bf16 %v418, %v414
        %v543 = vpack.c.bf16 %v419, %v415
        %v544 = vpack.c.bf16 %v424, %v420
        %v545 = vpack.c.bf16 %v425, %v421
        %v546 = vpack.c.bf16 %v426, %v422
        %v547 = vpack.c.bf16 %v427, %v423
        %v548 = vpack.c.bf16 %v432, %v428
        %v549 = vpack.c.bf16 %v433, %v429
        %v550 = vpack.c.bf16 %v434, %v430
        %v551 = vpack.c.bf16 %v435, %v431
        %v552 = vpack.c.bf16 %v440, %v436
        %v553 = vpack.c.bf16 %v441, %v437
        %v554 = vpack.c.bf16 %v442, %v438
        %v555 = vpack.c.bf16 %v443, %v439
        %v556 = vpack.c.bf16 %v448, %v444
        %v557 = vpack.c.bf16 %v449, %v445
        %v558 = vpack.c.bf16 %v450, %v446
        %v559 = vpack.c.bf16 %v451, %v447
        %v560 = vpack.c.bf16 %v456, %v452
        %v561 = vpack.c.bf16 %v457, %v453
        %v562 = vpack.c.bf16 %v458, %v454
        %v563 = vpack.c.bf16 %v459, %v455
        %v564 = vpack.c.bf16 %v464, %v460
        %v565 = vpack.c.bf16 %v465, %v461
        %v566 = vpack.c.bf16 %v466, %v462
        %v567 = vpack.c.bf16 %v467, %v463
        %v568 = vpack.c.bf16 %v472, %v468
        %v569 = vpack.c.bf16 %v473, %v469
        %v570 = vpack.c.bf16 %v474, %v470
        %v571 = vpack.c.bf16 %v475, %v471
        %v572 = vpack.c.bf16 %v480, %v476
        %v573 = vpack.c.bf16 %v481, %v477
        %v574 = vpack.c.bf16 %v482, %v478
        %v575 = vpack.c.bf16 %v483, %v479
        %v576 = vpack.c.bf16 %v488, %v484
        %v577 = vpack.c.bf16 %v489, %v485
        %v578 = vpack.c.bf16 %v490, %v486
        %v579 = vpack.c.bf16 %v491, %v487
        %v580 = vpack.c.bf16 %v496, %v492
        %v581 = vpack.c.bf16 %v497, %v493
        %v582 = vpack.c.bf16 %v498, %v494
        %v583 = vpack.c.bf16 %v499, %v495
        %v584 = vpack.c.bf16 %v504, %v500
        %v585 = vpack.c.bf16 %v505, %v501
        %v586 = vpack.c.bf16 %v506, %v502
        %v587 = vpack.c.bf16 %v507, %v503
        %v588 = vpack.c.bf16 %v512, %v508
        %v589 = vpack.c.bf16 %v513, %v509
        %v590 = vpack.c.bf16 %v514, %v510
        %v591 = vpack.c.bf16 %v515, %v511
        %v592 = vpack.c.bf16 %v520, %v516
        %v593 = vpack.c.bf16 %v521, %v517
        %v594 = vpack.c.bf16 %v522, %v518
        %v595 = vpack.c.bf16 %v523, %v519
        %v596 = vpack.c.bf16 %v528, %v524
        %v597 = vpack.c.bf16 %v529, %v525
        %v598 = vpack.c.bf16 %v530, %v526
        %v599 = vpack.c.bf16 %v531, %v527
        %v600 = vpack.c.bf16 %v536, %v532
        %v601 = vpack.c.bf16 %v537, %v533
        %v602 = vpack.c.bf16 %v538, %v534
        %v603 = vpack.c.bf16 %v539, %v535
        %v604 = vld [vmem:[#allocation6] sm:$0xff]
        %v605 = vld [vmem:[#allocation6 + $0x8] sm:$0xff]
        %v606 = vld [vmem:[#allocation6 + $0x10] sm:$0xff]
        %v607 = vld [vmem:[#allocation6 + $0x18] sm:$0xff]
        %v608 = vld [vmem:[#allocation6 + $0x20] sm:$0xff]
        %v609 = vld [vmem:[#allocation6 + $0x28] sm:$0xff]
        %v610 = vld [vmem:[#allocation6 + $0x30] sm:$0xff]
        %v611 = vld [vmem:[#allocation6 + $0x38] sm:$0xff]
        %v612 = vld [vmem:[#allocation6 + $0x40] sm:$0xff]
        %v613 = vld [vmem:[#allocation6 + $0x48] sm:$0xff]
        %v614 = vld [vmem:[#allocation6 + $0x50] sm:$0xff]
        %v615 = vld [vmem:[#allocation6 + $0x58] sm:$0xff]
        %v616 = vld [vmem:[#allocation6 + $0x60] sm:$0xff]
        %v617 = vld [vmem:[#allocation6 + $0x68] sm:$0xff]
        %v618 = vld [vmem:[#allocation6 + $0x70] sm:$0xff]
        %v619 = vld [vmem:[#allocation6 + $0x78] sm:$0xff]
        %v620 = vld [vmem:[#allocation6 + $0x80] sm:$0xff]
        %v621 = vld [vmem:[#allocation6 + $0x88] sm:$0xff]
        %v622 = vld [vmem:[#allocation6 + $0x90] sm:$0xff]
        %v623 = vld [vmem:[#allocation6 + $0x98] sm:$0xff]
        %v624 = vld [vmem:[#allocation6 + $0xa0] sm:$0xff]
        %v625 = vld [vmem:[#allocation6 + $0xa8] sm:$0xff]
        %v626 = vld [vmem:[#allocation6 + $0xb0] sm:$0xff]
        %v627 = vld [vmem:[#allocation6 + $0xb8] sm:$0xff]
        %v628 = vld [vmem:[#allocation6 + $0xc0] sm:$0xff]
        %v629 = vld [vmem:[#allocation6 + $0xc8] sm:$0xff]
        %v630 = vld [vmem:[#allocation6 + $0xd0] sm:$0xff]
        %v631 = vld [vmem:[#allocation6 + $0xd8] sm:$0xff]
        %v632 = vld [vmem:[#allocation6 + $0xe0] sm:$0xff]
        %v633 = vld [vmem:[#allocation6 + $0xe8] sm:$0xff]
        %v634 = vld [vmem:[#allocation6 + $0xf0] sm:$0xff]
        %v635 = vld [vmem:[#allocation6 + $0xf8] sm:$0xff]
        %v636 = vld [vmem:[#allocation6 + $0x100] sm:$0xff]
        %v637 = vld [vmem:[#allocation6 + $0x108] sm:$0xff]
        %v638 = vld [vmem:[#allocation6 + $0x110] sm:$0xff]
        %v639 = vld [vmem:[#allocation6 + $0x118] sm:$0xff]
        %v640 = vld [vmem:[#allocation6 + $0x120] sm:$0xff]
        %v641 = vld [vmem:[#allocation6 + $0x128] sm:$0xff]
        %v642 = vld [vmem:[#allocation6 + $0x130] sm:$0xff]
        %v643 = vld [vmem:[#allocation6 + $0x138] sm:$0xff]
        %v644 = vld [vmem:[#allocation6 + $0x140] sm:$0xff]
        %v645 = vld [vmem:[#allocation6 + $0x148] sm:$0xff]
        %v646 = vld [vmem:[#allocation6 + $0x150] sm:$0xff]
        %v647 = vld [vmem:[#allocation6 + $0x158] sm:$0xff]
        %v648 = vld [vmem:[#allocation6 + $0x160] sm:$0xff]
        %v649 = vld [vmem:[#allocation6 + $0x168] sm:$0xff]
        %v650 = vld [vmem:[#allocation6 + $0x170] sm:$0xff]
        %v651 = vld [vmem:[#allocation6 + $0x178] sm:$0xff]
        %v652 = vld [vmem:[#allocation6 + $0x180] sm:$0xff]
        %v653 = vld [vmem:[#allocation6 + $0x188] sm:$0xff]
        %v654 = vld [vmem:[#allocation6 + $0x190] sm:$0xff]
        %v655 = vld [vmem:[#allocation6 + $0x198] sm:$0xff]
        %v656 = vld [vmem:[#allocation6 + $0x1a0] sm:$0xff]
        %v657 = vld [vmem:[#allocation6 + $0x1a8] sm:$0xff]
        %v658 = vld [vmem:[#allocation6 + $0x1b0] sm:$0xff]
        %v659 = vld [vmem:[#allocation6 + $0x1b8] sm:$0xff]
        %v660 = vld [vmem:[#allocation6 + $0x1c0] sm:$0xff]
        %v661 = vld [vmem:[#allocation6 + $0x1c8] sm:$0xff]
        %v662 = vld [vmem:[#allocation6 + $0x1d0] sm:$0xff]
        %v663 = vld [vmem:[#allocation6 + $0x1d8] sm:$0xff]
        %v664 = vld [vmem:[#allocation6 + $0x1e0] sm:$0xff]
        %v665 = vld [vmem:[#allocation6 + $0x1e8] sm:$0xff]
        %v666 = vld [vmem:[#allocation6 + $0x1f0] sm:$0xff]
        %v667 = vld [vmem:[#allocation6 + $0x1f8] sm:$0xff]
        %v668 = vld [vmem:[%s2] sm:$0x3]
        %v670 = vlaneseq
        %v671 = vshrl.u32 %v670, 7
        %v672 = vsub.s32 0, %v671
        %v673 = vrot.slane %v668, %v672
        %v674 = vlaneseq
        %v675 = vshrl.u32 %v674, 7
        %v676 = vsub.s32 1, %v675
        %v677 = vrot.slane %v668, %v676
        %v744 = vunpack.c.l.b16 %v604
        %v745 = vunpack.c.h.b16 %v604
        %v746 = vunpack.c.l.b16 %v605
        %v747 = vunpack.c.h.b16 %v605
        %v748 = vunpack.c.l.b16 %v606
        %v749 = vunpack.c.h.b16 %v606
        %v750 = vunpack.c.l.b16 %v607
        %v751 = vunpack.c.h.b16 %v607
        %v752 = vunpack.c.l.b16 %v608
        %v753 = vunpack.c.h.b16 %v608
        %v754 = vunpack.c.l.b16 %v609
        %v755 = vunpack.c.h.b16 %v609
        %v756 = vunpack.c.l.b16 %v610
        %v757 = vunpack.c.h.b16 %v610
        %v758 = vunpack.c.l.b16 %v611
        %v759 = vunpack.c.h.b16 %v611
        %v760 = vunpack.c.l.b16 %v612
        %v761 = vunpack.c.h.b16 %v612
        %v762 = vunpack.c.l.b16 %v613
        %v763 = vunpack.c.h.b16 %v613
        %v764 = vunpack.c.l.b16 %v614
        %v765 = vunpack.c.h.b16 %v614
        %v766 = vunpack.c.l.b16 %v615
        %v767 = vunpack.c.h.b16 %v615
        %v768 = vunpack.c.l.b16 %v616
        %v769 = vunpack.c.h.b16 %v616
        %v770 = vunpack.c.l.b16 %v617
        %v771 = vunpack.c.h.b16 %v617
        %v772 = vunpack.c.l.b16 %v618
        %v773 = vunpack.c.h.b16 %v618
        %v774 = vunpack.c.l.b16 %v619
        %v775 = vunpack.c.h.b16 %v619
        %v776 = vunpack.c.l.b16 %v620
        %v777 = vunpack.c.h.b16 %v620
        %v778 = vunpack.c.l.b16 %v621
        %v779 = vunpack.c.h.b16 %v621
        %v780 = vunpack.c.l.b16 %v622
        %v781 = vunpack.c.h.b16 %v622
        %v782 = vunpack.c.l.b16 %v623
        %v783 = vunpack.c.h.b16 %v623
        %v784 = vunpack.c.l.b16 %v624
        %v785 = vunpack.c.h.b16 %v624
        %v786 = vunpack.c.l.b16 %v625
        %v787 = vunpack.c.h.b16 %v625
        %v788 = vunpack.c.l.b16 %v626
        %v789 = vunpack.c.h.b16 %v626
        %v790 = vunpack.c.l.b16 %v627
        %v791 = vunpack.c.h.b16 %v627
        %v792 = vunpack.c.l.b16 %v628
        %v793 = vunpack.c.h.b16 %v628
        %v794 = vunpack.c.l.b16 %v629
        %v795 = vunpack.c.h.b16 %v629
        %v796 = vunpack.c.l.b16 %v630
        %v797 = vunpack.c.h.b16 %v630
        %v798 = vunpack.c.l.b16 %v631
        %v799 = vunpack.c.h.b16 %v631
        %v800 = vunpack.c.l.b16 %v632
        %v801 = vunpack.c.h.b16 %v632
        %v802 = vunpack.c.l.b16 %v633
        %v803 = vunpack.c.h.b16 %v633
        %v804 = vunpack.c.l.b16 %v634
        %v805 = vunpack.c.h.b16 %v634
        %v806 = vunpack.c.l.b16 %v635
        %v807 = vunpack.c.h.b16 %v635
        %v808 = vunpack.c.l.b16 %v636
        %v809 = vunpack.c.h.b16 %v636
        %v810 = vunpack.c.l.b16 %v637
        %v811 = vunpack.c.h.b16 %v637
        %v812 = vunpack.c.l.b16 %v638
        %v813 = vunpack.c.h.b16 %v638
        %v814 = vunpack.c.l.b16 %v639
        %v815 = vunpack.c.h.b16 %v639
        %v816 = vunpack.c.l.b16 %v640
        %v817 = vunpack.c.h.b16 %v640
        %v818 = vunpack.c.l.b16 %v641
        %v819 = vunpack.c.h.b16 %v641
        %v820 = vunpack.c.l.b16 %v642
        %v821 = vunpack.c.h.b16 %v642
        %v822 = vunpack.c.l.b16 %v643
        %v823 = vunpack.c.h.b16 %v643
        %v824 = vunpack.c.l.b16 %v644
        %v825 = vunpack.c.h.b16 %v644
        %v826 = vunpack.c.l.b16 %v645
        %v827 = vunpack.c.h.b16 %v645
        %v828 = vunpack.c.l.b16 %v646
        %v829 = vunpack.c.h.b16 %v646
        %v830 = vunpack.c.l.b16 %v647
        %v831 = vunpack.c.h.b16 %v647
        %v832 = vunpack.c.l.b16 %v648
        %v833 = vunpack.c.h.b16 %v648
        %v834 = vunpack.c.l.b16 %v649
        %v835 = vunpack.c.h.b16 %v649
        %v836 = vunpack.c.l.b16 %v650
        %v837 = vunpack.c.h.b16 %v650
        %v838 = vunpack.c.l.b16 %v651
        %v839 = vunpack.c.h.b16 %v651
        %v840 = vunpack.c.l.b16 %v652
        %v841 = vunpack.c.h.b16 %v652
        %v842 = vunpack.c.l.b16 %v653
        %v843 = vunpack.c.h.b16 %v653
        %v844 = vunpack.c.l.b16 %v654
        %v845 = vunpack.c.h.b16 %v654
        %v846 = vunpack.c.l.b16 %v655
        %v847 = vunpack.c.h.b16 %v655
        %v848 = vunpack.c.l.b16 %v656
        %v849 = vunpack.c.h.b16 %v656
        %v850 = vunpack.c.l.b16 %v657
        %v851 = vunpack.c.h.b16 %v657
        %v852 = vunpack.c.l.b16 %v658
        %v853 = vunpack.c.h.b16 %v658
        %v854 = vunpack.c.l.b16 %v659
        %v855 = vunpack.c.h.b16 %v659
        %v856 = vunpack.c.l.b16 %v660
        %v857 = vunpack.c.h.b16 %v660
        %v858 = vunpack.c.l.b16 %v661
        %v859 = vunpack.c.h.b16 %v661
        %v860 = vunpack.c.l.b16 %v662
        %v861 = vunpack.c.h.b16 %v662
        %v862 = vunpack.c.l.b16 %v663
        %v863 = vunpack.c.h.b16 %v663
        %v864 = vunpack.c.l.b16 %v664
        %v865 = vunpack.c.h.b16 %v664
        %v866 = vunpack.c.l.b16 %v665
        %v867 = vunpack.c.h.b16 %v665
        %v868 = vunpack.c.l.b16 %v666
        %v869 = vunpack.c.h.b16 %v666
        %v870 = vunpack.c.l.b16 %v667
        %v871 = vunpack.c.h.b16 %v667
        %v872 = vpack.c.b16 %v746, %v744
        %v873 = vpack.c.b16 %v747, %v745
        %v874 = vpack.c.b16 %v750, %v748
        %v875 = vpack.c.b16 %v751, %v749
        %v876 = vpack.c.b16 %v754, %v752
        %v877 = vpack.c.b16 %v755, %v753
        %v878 = vpack.c.b16 %v758, %v756
        %v879 = vpack.c.b16 %v759, %v757
        %v880 = vpack.c.b16 %v762, %v760
        %v881 = vpack.c.b16 %v763, %v761
        %v882 = vpack.c.b16 %v766, %v764
        %v883 = vpack.c.b16 %v767, %v765
        %v884 = vpack.c.b16 %v770, %v768
        %v885 = vpack.c.b16 %v771, %v769
        %v886 = vpack.c.b16 %v774, %v772
        %v887 = vpack.c.b16 %v775, %v773
        %v888 = vpack.c.b16 %v778, %v776
        %v889 = vpack.c.b16 %v779, %v777
        %v890 = vpack.c.b16 %v782, %v780
        %v891 = vpack.c.b16 %v783, %v781
        %v892 = vpack.c.b16 %v786, %v784
        %v893 = vpack.c.b16 %v787, %v785
        %v894 = vpack.c.b16 %v790, %v788
        %v895 = vpack.c.b16 %v791, %v789
        %v896 = vpack.c.b16 %v794, %v792
        %v897 = vpack.c.b16 %v795, %v793
        %v898 = vpack.c.b16 %v798, %v796
        %v899 = vpack.c.b16 %v799, %v797
        %v900 = vpack.c.b16 %v802, %v800
        %v901 = vpack.c.b16 %v803, %v801
        %v902 = vpack.c.b16 %v806, %v804
        %v903 = vpack.c.b16 %v807, %v805
        %v904 = vpack.c.b16 %v810, %v808
        %v905 = vpack.c.b16 %v811, %v809
        %v906 = vpack.c.b16 %v814, %v812
        %v907 = vpack.c.b16 %v815, %v813
        %v908 = vpack.c.b16 %v818, %v816
        %v909 = vpack.c.b16 %v819, %v817
        %v910 = vpack.c.b16 %v822, %v820
        %v911 = vpack.c.b16 %v823, %v821
        %v912 = vpack.c.b16 %v826, %v824
        %v913 = vpack.c.b16 %v827, %v825
        %v914 = vpack.c.b16 %v830, %v828
        %v915 = vpack.c.b16 %v831, %v829
        %v916 = vpack.c.b16 %v834, %v832
        %v917 = vpack.c.b16 %v835, %v833
        %v918 = vpack.c.b16 %v838, %v836
        %v919 = vpack.c.b16 %v839, %v837
        %v920 = vpack.c.b16 %v842, %v840
        %v921 = vpack.c.b16 %v843, %v841
        %v922 = vpack.c.b16 %v846, %v844
        %v923 = vpack.c.b16 %v847, %v845
        %v924 = vpack.c.b16 %v850, %v848
        %v925 = vpack.c.b16 %v851, %v849
        %v926 = vpack.c.b16 %v854, %v852
        %v927 = vpack.c.b16 %v855, %v853
        %v928 = vpack.c.b16 %v858, %v856
        %v929 = vpack.c.b16 %v859, %v857
        %v930 = vpack.c.b16 %v862, %v860
        %v931 = vpack.c.b16 %v863, %v861
        %v932 = vpack.c.b16 %v866, %v864
        %v933 = vpack.c.b16 %v867, %v865
        %v934 = vpack.c.b16 %v870, %v868
        %v935 = vpack.c.b16 %v871, %v869
        %1000 = vmatprep.subr.bf16.mxu0 %v873
        %1001 = vmatpush1.bf16.msra.mxu0 %v872
        %1002 = vmatprep.subr.bf16.mxu0 %v875
        %1003 = vmatpush1.bf16.msra.mxu0 %v874
        %1004 = vmatprep.subr.bf16.mxu0 %v877
        %1005 = vmatpush1.bf16.msra.mxu0 %v876
        %1006 = vmatprep.subr.bf16.mxu0 %v879
        %1007 = vmatpush1.bf16.msra.mxu0 %v878
        %1008 = vmatprep.subr.bf16.mxu0 %v881
        %1009 = vmatpush1.bf16.msra.mxu0 %v880
        %1010 = vmatprep.subr.bf16.mxu0 %v883
        %1011 = vmatpush1.bf16.msra.mxu0 %v882
        %1012 = vmatprep.subr.bf16.mxu0 %v885
        %1013 = vmatpush1.bf16.msra.mxu0 %v884
        %1014 = vmatprep.subr.bf16.mxu0 %v887
        %1015 = vmatpush1.bf16.msra.mxu0 %v886
        %1016 = vmatprep.subr.bf16.mxu0 %v889
        %1017 = vmatpush1.bf16.msra.mxu0 %v888
        %1018 = vmatprep.subr.bf16.mxu0 %v891
        %1019 = vmatpush1.bf16.msra.mxu0 %v890
        %1020 = vmatprep.subr.bf16.mxu0 %v893
        %1021 = vmatpush1.bf16.msra.mxu0 %v892
        %1022 = vmatprep.subr.bf16.mxu0 %v895
        %1023 = vmatpush1.bf16.msra.mxu0 %v894
        %1024 = vmatprep.subr.bf16.mxu0 %v897
        %1025 = vmatpush1.bf16.msra.mxu0 %v896
        %1026 = vmatprep.subr.bf16.mxu0 %v899
        %1027 = vmatpush1.bf16.msra.mxu0 %v898
        %1028 = vmatprep.subr.bf16.mxu0 %v901
        %1029 = vmatpush1.bf16.msra.mxu0 %v900
        %1030 = vmatprep.subr.bf16.mxu0 %v903
        %1031 = vmatpush1.bf16.msra.mxu0 %v902
        %1032 = vmatprep.mubr.bf16.mxu0 %v541
        %1033 = vmatmul.mubr.bf16.gmra.mrb[0].mxu0 %v540
        %v1034 = vpop.f32.mrb[0].mxu0
        %v1035 = vadd.f32 %v673, %v1034
        %v1036 = vpop.f32.mrb[0].mxu0
        %v1037 = vadd.f32 %v677, %v1036
        %v1038 = vpop.f32.mrb[0].mxu0
        %v1039 = vadd.f32 %v673, %v1038
        %v1040 = vpop.f32.mrb[0].mxu0
        %v1041 = vadd.f32 %v677, %v1040
        %1042 = vmatprep.mubr.bf16.mxu0 %v545
        %1043 = vmatmul.mubr.bf16.gmra.mrb[0].mxu0 %v544
        %v1044 = vpop.f32.mrb[0].mxu0
        %v1045 = vadd.f32 %v673, %v1044
        %v1046 = vpop.f32.mrb[0].mxu0
        %v1047 = vadd.f32 %v677, %v1046
        %v1048 = vpop.f32.mrb[0].mxu0
        %v1049 = vadd.f32 %v673, %v1048
        %v1050 = vpop.f32.mrb[0].mxu0
        %v1051 = vadd.f32 %v677, %v1050
        %1052 = vmatprep.mubr.bf16.mxu0 %v549
        %1053 = vmatmul.mubr.bf16.gmra.mrb[0].mxu0 %v548
        %v1054 = vpop.f32.mrb[0].mxu0
        %v1055 = vadd.f32 %v673, %v1054
        %v1056 = vpop.f32.mrb[0].mxu0
        %v1057 = vadd.f32 %v677, %v1056
        %v1058 = vpop.f32.mrb[0].mxu0
        %v1059 = vadd.f32 %v673, %v1058
        %v1060 = vpop.f32.mrb[0].mxu0
        %v1061 = vadd.f32 %v677, %v1060
        %1062 = vmatprep.mubr.bf16.mxu0 %v553
        %1063 = vmatmul.mubr.bf16.gmra.mrb[0].mxu0 %v552
        %v1064 = vpop.f32.mrb[0].mxu0
        %v1065 = vadd.f32 %v673, %v1064
        %v1066 = vpop.f32.mrb[0].mxu0
        %v1067 = vadd.f32 %v677, %v1066
        %v1068 = vpop.f32.mrb[0].mxu0
        %v1069 = vadd.f32 %v673, %v1068
        %v1070 = vpop.f32.mrb[0].mxu0
        %v1071 = vadd.f32 %v677, %v1070
        %1072 = vmatprep.mubr.bf16.mxu0 %v557
        %1073 = vmatmul.mubr.bf16.gmra.mrb[0].mxu0 %v556
        %v1074 = vpop.f32.mrb[0].mxu0
        %v1075 = vadd.f32 %v673, %v1074
        %v1076 = vpop.f32.mrb[0].mxu0
        %v1077 = vadd.f32 %v677, %v1076
        %v1078 = vpop.f32.mrb[0].mxu0
        %v1079 = vadd.f32 %v673, %v1078
        %v1080 = vpop.f32.mrb[0].mxu0
        %v1081 = vadd.f32 %v677, %v1080
        %1082 = vmatprep.mubr.bf16.mxu0 %v561
        %1083 = vmatmul.mubr.bf16.gmra.mrb[0].mxu0 %v560
        %v1084 = vpop.f32.mrb[0].mxu0
        %v1085 = vadd.f32 %v673, %v1084
        %v1086 = vpop.f32.mrb[0].mxu0
        %v1087 = vadd.f32 %v677, %v1086
        %v1088 = vpop.f32.mrb[0].mxu0
        %v1089 = vadd.f32 %v673, %v1088
        %v1090 = vpop.f32.mrb[0].mxu0
        %v1091 = vadd.f32 %v677, %v1090
        %1092 = vmatprep.mubr.bf16.mxu0 %v565
        %1093 = vmatmul.mubr.bf16.gmra.mrb[0].mxu0 %v564
        %v1094 = vpop.f32.mrb[0].mxu0
        %v1095 = vadd.f32 %v673, %v1094
        %v1096 = vpop.f32.mrb[0].mxu0
        %v1097 = vadd.f32 %v677, %v1096
        %v1098 = vpop.f32.mrb[0].mxu0
        %v1099 = vadd.f32 %v673, %v1098
        %v1100 = vpop.f32.mrb[0].mxu0
        %v1101 = vadd.f32 %v677, %v1100
        %1102 = vmatprep.mubr.bf16.mxu0 %v569
        %1103 = vmatmul.mubr.bf16.gmra.mrb[0].mxu0 %v568
        %v1104 = vpop.f32.mrb[0].mxu0
        %v1105 = vadd.f32 %v673, %v1104
        %v1106 = vpop.f32.mrb[0].mxu0
        %v1107 = vadd.f32 %v677, %v1106
        %v1108 = vpop.f32.mrb[0].mxu0
        %v1109 = vadd.f32 %v673, %v1108
        %v1110 = vpop.f32.mrb[0].mxu0
        %v1111 = vadd.f32 %v677, %v1110
        %1112 = vmatprep.mubr.bf16.mxu0 %v573
        %1113 = vmatmul.mubr.bf16.gmra.mrb[0].mxu0 %v572
        %v1114 = vpop.f32.mrb[0].mxu0
        %v1115 = vadd.f32 %v673, %v1114
        %v1116 = vpop.f32.mrb[0].mxu0
        %v1117 = vadd.f32 %v677, %v1116
        %v1118 = vpop.f32.mrb[0].mxu0
        %v1119 = vadd.f32 %v673, %v1118
        %v1120 = vpop.f32.mrb[0].mxu0
        %v1121 = vadd.f32 %v677, %v1120
        %1122 = vmatprep.mubr.bf16.mxu0 %v577
        %1123 = vmatmul.mubr.bf16.gmra.mrb[0].mxu0 %v576
        %v1124 = vpop.f32.mrb[0].mxu0
        %v1125 = vadd.f32 %v673, %v1124
        %v1126 = vpop.f32.mrb[0].mxu0
        %v1127 = vadd.f32 %v677, %v1126
        %v1128 = vpop.f32.mrb[0].mxu0
        %v1129 = vadd.f32 %v673, %v1128
        %v1130 = vpop.f32.mrb[0].mxu0
        %v1131 = vadd.f32 %v677, %v1130
        %1132 = vmatprep.mubr.bf16.mxu0 %v581
        %1133 = vmatmul.mubr.bf16.gmra.mrb[0].mxu0 %v580
        %v1134 = vpop.f32.mrb[0].mxu0
        %v1135 = vadd.f32 %v673, %v1134
        %v1136 = vpop.f32.mrb[0].mxu0
        %v1137 = vadd.f32 %v677, %v1136
        %v1138 = vpop.f32.mrb[0].mxu0
        %v1139 = vadd.f32 %v673, %v1138
        %v1140 = vpop.f32.mrb[0].mxu0
        %v1141 = vadd.f32 %v677, %v1140
        %1142 = vmatprep.mubr.bf16.mxu0 %v585
        %1143 = vmatmul.mubr.bf16.gmra.mrb[0].mxu0 %v584
        %v1144 = vpop.f32.mrb[0].mxu0
        %v1145 = vadd.f32 %v673, %v1144
        %v1146 = vpop.f32.mrb[0].mxu0
        %v1147 = vadd.f32 %v677, %v1146
        %v1148 = vpop.f32.mrb[0].mxu0
        %v1149 = vadd.f32 %v673, %v1148
        %v1150 = vpop.f32.mrb[0].mxu0
        %v1151 = vadd.f32 %v677, %v1150
        %1152 = vmatprep.mubr.bf16.mxu0 %v589
        %1153 = vmatmul.mubr.bf16.gmra.mrb[0].mxu0 %v588
        %v1154 = vpop.f32.mrb[0].mxu0
        %v1155 = vadd.f32 %v673, %v1154
        %v1156 = vpop.f32.mrb[0].mxu0
        %v1157 = vadd.f32 %v677, %v1156
        %v1158 = vpop.f32.mrb[0].mxu0
        %v1159 = vadd.f32 %v673, %v1158
        %v1160 = vpop.f32.mrb[0].mxu0
        %v1161 = vadd.f32 %v677, %v1160
        %1162 = vmatprep.mubr.bf16.mxu0 %v593
        %1163 = vmatmul.mubr.bf16.gmra.mrb[0].mxu0 %v592
        %v1164 = vpop.f32.mrb[0].mxu0
        %v1165 = vadd.f32 %v673, %v1164
        %v1166 = vpop.f32.mrb[0].mxu0
        %v1167 = vadd.f32 %v677, %v1166
        %v1168 = vpop.f32.mrb[0].mxu0
        %v1169 = vadd.f32 %v673, %v1168
        %v1170 = vpop.f32.mrb[0].mxu0
        %v1171 = vadd.f32 %v677, %v1170
        %1172 = vmatprep.mubr.bf16.mxu0 %v597
        %1173 = vmatmul.mubr.bf16.gmra.mrb[0].mxu0 %v596
        %v1174 = vpop.f32.mrb[0].mxu0
        %v1175 = vadd.f32 %v673, %v1174
        %v1176 = vpop.f32.mrb[0].mxu0
        %v1177 = vadd.f32 %v677, %v1176
        %v1178 = vpop.f32.mrb[0].mxu0
        %v1179 = vadd.f32 %v673, %v1178
        %v1180 = vpop.f32.mrb[0].mxu0
        %v1181 = vadd.f32 %v677, %v1180
        %1182 = vmatprep.mubr.bf16.mxu0 %v601
        %1183 = vmatmul.mubr.bf16.gmra.mrb[0].mxu0 %v600
        %v1184 = vpop.f32.mrb[0].mxu0
        %v1185 = vadd.f32 %v673, %v1184
        %v1186 = vpop.f32.mrb[0].mxu0
        %v1187 = vadd.f32 %v677, %v1186
        %v1188 = vpop.f32.mrb[0].mxu0
        %v1189 = vadd.f32 %v673, %v1188
        %v1190 = vpop.f32.mrb[0].mxu0
        %v1191 = vadd.f32 %v677, %v1190
        %1192 = vdwg.mxu0
        %1193 = vmatprep.subr.bf16.mxu0 %v905
        %1194 = vmatpush1.bf16.msra.mxu0 %v904
        %1195 = vmatprep.subr.bf16.mxu0 %v907
        %1196 = vmatpush1.bf16.msra.mxu0 %v906
        %1197 = vmatprep.subr.bf16.mxu0 %v909
        %1198 = vmatpush1.bf16.msra.mxu0 %v908
        %1199 = vmatprep.subr.bf16.mxu0 %v911
        %1200 = vmatpush1.bf16.msra.mxu0 %v910
        %1201 = vmatprep.subr.bf16.mxu0 %v913
        %1202 = vmatpush1.bf16.msra.mxu0 %v912
        %1203 = vmatprep.subr.bf16.mxu0 %v915
        %1204 = vmatpush1.bf16.msra.mxu0 %v914
        %1205 = vmatprep.subr.bf16.mxu0 %v917
        %1206 = vmatpush1.bf16.msra.mxu0 %v916
        %1207 = vmatprep.subr.bf16.mxu0 %v919
        %1208 = vmatpush1.bf16.msra.mxu0 %v918
        %1209 = vmatprep.subr.bf16.mxu0 %v921
        %1210 = vmatpush1.bf16.msra.mxu0 %v920
        %1211 = vmatprep.subr.bf16.mxu0 %v923
        %1212 = vmatpush1.bf16.msra.mxu0 %v922
        %1213 = vmatprep.subr.bf16.mxu0 %v925
        %1214 = vmatpush1.bf16.msra.mxu0 %v924
        %1215 = vmatprep.subr.bf16.mxu0 %v927
        %1216 = vmatpush1.bf16.msra.mxu0 %v926
        %1217 = vmatprep.subr.bf16.mxu0 %v929
        %1218 = vmatpush1.bf16.msra.mxu0 %v928
        %1219 = vmatprep.subr.bf16.mxu0 %v931
        %1220 = vmatpush1.bf16.msra.mxu0 %v930
        %1221 = vmatprep.subr.bf16.mxu0 %v933
        %1222 = vmatpush1.bf16.msra.mxu0 %v932
        %1223 = vmatprep.subr.bf16.mxu0 %v935
        %1224 = vmatpush1.bf16.msra.mxu0 %v934
        %1225 = vmatprep.mubr.bf16.mxu0 %v543
        %1226 = vmatmul.mubr.bf16.gmra.mrb[0].mxu0 %v542
        %v1227 = vpop.f32.mrb[0].mxu0
        %v1228 = vadd.f32 %v1035, %v1227
        %v1229 = vpop.f32.mrb[0].mxu0
        %v1230 = vadd.f32 %v1037, %v1229
        %v1231 = vpop.f32.mrb[0].mxu0
        %v1232 = vadd.f32 %v1039, %v1231
        %v1233 = vpop.f32.mrb[0].mxu0
        %v1234 = vadd.f32 %v1041, %v1233
        %1235 = vmatprep.mubr.bf16.mxu0 %v547
        %1236 = vmatmul.mubr.bf16.gmra.mrb[0].mxu0 %v546
        %v1237 = vpop.f32.mrb[0].mxu0
        %v1238 = vadd.f32 %v1045, %v1237
        %v1239 = vpop.f32.mrb[0].mxu0
        %v1240 = vadd.f32 %v1047, %v1239
        %v1241 = vpop.f32.mrb[0].mxu0
        %v1242 = vadd.f32 %v1049, %v1241
        %v1243 = vpop.f32.mrb[0].mxu0
        %v1244 = vadd.f32 %v1051, %v1243
        %1245 = vmatprep.mubr.bf16.mxu0 %v551
        %1246 = vmatmul.mubr.bf16.gmra.mrb[0].mxu0 %v550
        %v1247 = vpop.f32.mrb[0].mxu0
        %v1248 = vadd.f32 %v1055, %v1247
        %v1249 = vpop.f32.mrb[0].mxu0
        %v1250 = vadd.f32 %v1057, %v1249
        %v1251 = vpop.f32.mrb[0].mxu0
        %v1252 = vadd.f32 %v1059, %v1251
        %v1253 = vpop.f32.mrb[0].mxu0
        %v1254 = vadd.f32 %v1061, %v1253
        %1255 = vmatprep.mubr.bf16.mxu0 %v555
        %1256 = vmatmul.mubr.bf16.gmra.mrb[0].mxu0 %v554
        %v1257 = vpop.f32.mrb[0].mxu0
        %v1258 = vadd.f32 %v1065, %v1257
        %v1259 = vpop.f32.mrb[0].mxu0
        %v1260 = vadd.f32 %v1067, %v1259
        %v1261 = vpop.f32.mrb[0].mxu0
        %v1262 = vadd.f32 %v1069, %v1261
        %v1263 = vpop.f32.mrb[0].mxu0
        %v1264 = vadd.f32 %v1071, %v1263
        %1265 = vmatprep.mubr.bf16.mxu0 %v559
        %1266 = vmatmul.mubr.bf16.gmra.mrb[0].mxu0 %v558
        %v1267 = vpop.f32.mrb[0].mxu0
        %v1268 = vadd.f32 %v1075, %v1267
        %v1269 = vpop.f32.mrb[0].mxu0
        %v1270 = vadd.f32 %v1077, %v1269
        %v1271 = vpop.f32.mrb[0].mxu0
        %v1272 = vadd.f32 %v1079, %v1271
        %v1273 = vpop.f32.mrb[0].mxu0
        %v1274 = vadd.f32 %v1081, %v1273
        %1275 = vmatprep.mubr.bf16.mxu0 %v563
        %1276 = vmatmul.mubr.bf16.gmra.mrb[0].mxu0 %v562
        %v1277 = vpop.f32.mrb[0].mxu0
        %v1278 = vadd.f32 %v1085, %v1277
        %v1279 = vpop.f32.mrb[0].mxu0
        %v1280 = vadd.f32 %v1087, %v1279
        %v1281 = vpop.f32.mrb[0].mxu0
        %v1282 = vadd.f32 %v1089, %v1281
        %v1283 = vpop.f32.mrb[0].mxu0
        %v1284 = vadd.f32 %v1091, %v1283
        %1285 = vmatprep.mubr.bf16.mxu0 %v567
        %1286 = vmatmul.mubr.bf16.gmra.mrb[0].mxu0 %v566
        %v1287 = vpop.f32.mrb[0].mxu0
        %v1288 = vadd.f32 %v1095, %v1287
        %v1289 = vpop.f32.mrb[0].mxu0
        %v1290 = vadd.f32 %v1097, %v1289
        %v1291 = vpop.f32.mrb[0].mxu0
        %v1292 = vadd.f32 %v1099, %v1291
        %v1293 = vpop.f32.mrb[0].mxu0
        %v1294 = vadd.f32 %v1101, %v1293
        %1295 = vmatprep.mubr.bf16.mxu0 %v571
        %1296 = vmatmul.mubr.bf16.gmra.mrb[0].mxu0 %v570
        %v1297 = vpop.f32.mrb[0].mxu0
        %v1298 = vadd.f32 %v1105, %v1297
        %v1299 = vpop.f32.mrb[0].mxu0
        %v1300 = vadd.f32 %v1107, %v1299
        %v1301 = vpop.f32.mrb[0].mxu0
        %v1302 = vadd.f32 %v1109, %v1301
        %v1303 = vpop.f32.mrb[0].mxu0
        %v1304 = vadd.f32 %v1111, %v1303
        %1305 = vmatprep.mubr.bf16.mxu0 %v575
        %1306 = vmatmul.mubr.bf16.gmra.mrb[0].mxu0 %v574
        %v1307 = vpop.f32.mrb[0].mxu0
        %v1308 = vadd.f32 %v1115, %v1307
        %v1309 = vpop.f32.mrb[0].mxu0
        %v1310 = vadd.f32 %v1117, %v1309
        %v1311 = vpop.f32.mrb[0].mxu0
        %v1312 = vadd.f32 %v1119, %v1311
        %v1313 = vpop.f32.mrb[0].mxu0
        %v1314 = vadd.f32 %v1121, %v1313
        %1315 = vmatprep.mubr.bf16.mxu0 %v579
        %1316 = vmatmul.mubr.bf16.gmra.mrb[0].mxu0 %v578
        %v1317 = vpop.f32.mrb[0].mxu0
        %v1318 = vadd.f32 %v1125, %v1317
        %v1319 = vpop.f32.mrb[0].mxu0
        %v1320 = vadd.f32 %v1127, %v1319
        %v1321 = vpop.f32.mrb[0].mxu0
        %v1322 = vadd.f32 %v1129, %v1321
        %v1323 = vpop.f32.mrb[0].mxu0
        %v1324 = vadd.f32 %v1131, %v1323
        %1325 = vmatprep.mubr.bf16.mxu0 %v583
        %1326 = vmatmul.mubr.bf16.gmra.mrb[0].mxu0 %v582
        %v1327 = vpop.f32.mrb[0].mxu0
        %v1328 = vadd.f32 %v1135, %v1327
        %v1329 = vpop.f32.mrb[0].mxu0
        %v1330 = vadd.f32 %v1137, %v1329
        %v1331 = vpop.f32.mrb[0].mxu0
        %v1332 = vadd.f32 %v1139, %v1331
        %v1333 = vpop.f32.mrb[0].mxu0
        %v1334 = vadd.f32 %v1141, %v1333
        %1335 = vmatprep.mubr.bf16.mxu0 %v587
        %1336 = vmatmul.mubr.bf16.gmra.mrb[0].mxu0 %v586
        %v1337 = vpop.f32.mrb[0].mxu0
        %v1338 = vadd.f32 %v1145, %v1337
        %v1339 = vpop.f32.mrb[0].mxu0
        %v1340 = vadd.f32 %v1147, %v1339
        %v1341 = vpop.f32.mrb[0].mxu0
        %v1342 = vadd.f32 %v1149, %v1341
        %v1343 = vpop.f32.mrb[0].mxu0
        %v1344 = vadd.f32 %v1151, %v1343
        %1345 = vmatprep.mubr.bf16.mxu0 %v591
        %1346 = vmatmul.mubr.bf16.gmra.mrb[0].mxu0 %v590
        %v1347 = vpop.f32.mrb[0].mxu0
        %v1348 = vadd.f32 %v1155, %v1347
        %v1349 = vpop.f32.mrb[0].mxu0
        %v1350 = vadd.f32 %v1157, %v1349
        %v1351 = vpop.f32.mrb[0].mxu0
        %v1352 = vadd.f32 %v1159, %v1351
        %v1353 = vpop.f32.mrb[0].mxu0
        %v1354 = vadd.f32 %v1161, %v1353
        %1355 = vmatprep.mubr.bf16.mxu0 %v595
        %1356 = vmatmul.mubr.bf16.gmra.mrb[0].mxu0 %v594
        %v1357 = vpop.f32.mrb[0].mxu0
        %v1358 = vadd.f32 %v1165, %v1357
        %v1359 = vpop.f32.mrb[0].mxu0
        %v1360 = vadd.f32 %v1167, %v1359
        %v1361 = vpop.f32.mrb[0].mxu0
        %v1362 = vadd.f32 %v1169, %v1361
        %v1363 = vpop.f32.mrb[0].mxu0
        %v1364 = vadd.f32 %v1171, %v1363
        %1365 = vmatprep.mubr.bf16.mxu0 %v599
        %1366 = vmatmul.mubr.bf16.gmra.mrb[0].mxu0 %v598
        %v1367 = vpop.f32.mrb[0].mxu0
        %v1368 = vadd.f32 %v1175, %v1367
        %v1369 = vpop.f32.mrb[0].mxu0
        %v1370 = vadd.f32 %v1177, %v1369
        %v1371 = vpop.f32.mrb[0].mxu0
        %v1372 = vadd.f32 %v1179, %v1371
        %v1373 = vpop.f32.mrb[0].mxu0
        %v1374 = vadd.f32 %v1181, %v1373
        %1375 = vmatprep.mubr.bf16.mxu0 %v603
        %1376 = vmatmul.mubr.bf16.gmra.mrb[0].mxu0 %v602
        %v1377 = vpop.f32.mrb[0].mxu0
        %v1378 = vadd.f32 %v1185, %v1377
        %v1379 = vpop.f32.mrb[0].mxu0
        %v1380 = vadd.f32 %v1187, %v1379
        %v1381 = vpop.f32.mrb[0].mxu0
        %v1382 = vadd.f32 %v1189, %v1381
        %v1383 = vpop.f32.mrb[0].mxu0
        %v1384 = vadd.f32 %v1191, %v1383
        %1385 = vdwg.mxu0
        %v1386 = vmax.f32 %v1228, 0.0
        %v1387 = vmax.f32 %v1230, 0.0
        %v1388 = vmax.f32 %v1232, 0.0
        %v1389 = vmax.f32 %v1234, 0.0
        %v1390 = vmax.f32 %v1238, 0.0
        %v1391 = vmax.f32 %v1240, 0.0
        %v1392 = vmax.f32 %v1242, 0.0
        %v1393 = vmax.f32 %v1244, 0.0
        %v1394 = vmax.f32 %v1248, 0.0
        %v1395 = vmax.f32 %v1250, 0.0
        %v1396 = vmax.f32 %v1252, 0.0
        %v1397 = vmax.f32 %v1254, 0.0
        %v1398 = vmax.f32 %v1258, 0.0
        %v1399 = vmax.f32 %v1260, 0.0
        %v1400 = vmax.f32 %v1262, 0.0
        %v1401 = vmax.f32 %v1264, 0.0
        %v1402 = vmax.f32 %v1268, 0.0
        %v1403 = vmax.f32 %v1270, 0.0
        %v1404 = vmax.f32 %v1272, 0.0
        %v1405 = vmax.f32 %v1274, 0.0
        %v1406 = vmax.f32 %v1278, 0.0
        %v1407 = vmax.f32 %v1280, 0.0
        %v1408 = vmax.f32 %v1282, 0.0
        %v1409 = vmax.f32 %v1284, 0.0
        %v1410 = vmax.f32 %v1288, 0.0
        %v1411 = vmax.f32 %v1290, 0.0
        %v1412 = vmax.f32 %v1292, 0.0
        %v1413 = vmax.f32 %v1294, 0.0
        %v1414 = vmax.f32 %v1298, 0.0
        %v1415 = vmax.f32 %v1300, 0.0
        %v1416 = vmax.f32 %v1302, 0.0
        %v1417 = vmax.f32 %v1304, 0.0
        %v1418 = vmax.f32 %v1308, 0.0
        %v1419 = vmax.f32 %v1310, 0.0
        %v1420 = vmax.f32 %v1312, 0.0
        %v1421 = vmax.f32 %v1314, 0.0
        %v1422 = vmax.f32 %v1318, 0.0
        %v1423 = vmax.f32 %v1320, 0.0
        %v1424 = vmax.f32 %v1322, 0.0
        %v1425 = vmax.f32 %v1324, 0.0
        %v1426 = vmax.f32 %v1328, 0.0
        %v1427 = vmax.f32 %v1330, 0.0
        %v1428 = vmax.f32 %v1332, 0.0
        %v1429 = vmax.f32 %v1334, 0.0
        %v1430 = vmax.f32 %v1338, 0.0
        %v1431 = vmax.f32 %v1340, 0.0
        %v1432 = vmax.f32 %v1342, 0.0
        %v1433 = vmax.f32 %v1344, 0.0
        %v1434 = vmax.f32 %v1348, 0.0
        %v1435 = vmax.f32 %v1350, 0.0
        %v1436 = vmax.f32 %v1352, 0.0
        %v1437 = vmax.f32 %v1354, 0.0
        %v1438 = vmax.f32 %v1358, 0.0
        %v1439 = vmax.f32 %v1360, 0.0
        %v1440 = vmax.f32 %v1362, 0.0
        %v1441 = vmax.f32 %v1364, 0.0
        %v1442 = vmax.f32 %v1368, 0.0
        %v1443 = vmax.f32 %v1370, 0.0
        %v1444 = vmax.f32 %v1372, 0.0
        %v1445 = vmax.f32 %v1374, 0.0
        %v1446 = vmax.f32 %v1378, 0.0
        %v1447 = vmax.f32 %v1380, 0.0
        %v1448 = vmax.f32 %v1382, 0.0
        %v1449 = vmax.f32 %v1384, 0.0
        %v1450 = vpack.c.bf16 %v1388, %v1386
        %v1451 = vpack.c.bf16 %v1389, %v1387
        %v1452 = vpack.c.bf16 %v1392, %v1390
        %v1453 = vpack.c.bf16 %v1393, %v1391
        %v1454 = vpack.c.bf16 %v1396, %v1394
        %v1455 = vpack.c.bf16 %v1397, %v1395
        %v1456 = vpack.c.bf16 %v1400, %v1398
        %v1457 = vpack.c.bf16 %v1401, %v1399
        %v1458 = vpack.c.bf16 %v1404, %v1402
        %v1459 = vpack.c.bf16 %v1405, %v1403
        %v1460 = vpack.c.bf16 %v1408, %v1406
        %v1461 = vpack.c.bf16 %v1409, %v1407
        %v1462 = vpack.c.bf16 %v1412, %v1410
        %v1463 = vpack.c.bf16 %v1413, %v1411
        %v1464 = vpack.c.bf16 %v1416, %v1414
        %v1465 = vpack.c.bf16 %v1417, %v1415
        %v1466 = vpack.c.bf16 %v1420, %v1418
        %v1467 = vpack.c.bf16 %v1421, %v1419
        %v1468 = vpack.c.bf16 %v1424, %v1422
        %v1469 = vpack.c.bf16 %v1425, %v1423
        %v1470 = vpack.c.bf16 %v1428, %v1426
        %v1471 = vpack.c.bf16 %v1429, %v1427
        %v1472 = vpack.c.bf16 %v1432, %v1430
        %v1473 = vpack.c.bf16 %v1433, %v1431
        %v1474 = vpack.c.bf16 %v1436, %v1434
        %v1475 = vpack.c.bf16 %v1437, %v1435
        %v1476 = vpack.c.bf16 %v1440, %v1438
        %v1477 = vpack.c.bf16 %v1441, %v1439
        %v1478 = vpack.c.bf16 %v1444, %v1442
        %v1479 = vpack.c.bf16 %v1445, %v1443
        %v1480 = vpack.c.bf16 %v1448, %v1446
        %v1481 = vpack.c.bf16 %v1449, %v1447
        %v1482 = vld [vmem:[#allocation8] sm:$0xff]
        %v1483 = vld [vmem:[#allocation8 + $0x8] sm:$0xff]
        %v1484 = vld [vmem:[#allocation8 + $0x10] sm:$0xff]
        %v1485 = vld [vmem:[#allocation8 + $0x18] sm:$0xff]
        %v1486 = vld [vmem:[#allocation8 + $0x20] sm:$0xff]
        %v1487 = vld [vmem:[#allocation8 + $0x28] sm:$0xff]
        %v1488 = vld [vmem:[#allocation8 + $0x30] sm:$0xff]
        %v1489 = vld [vmem:[#allocation8 + $0x38] sm:$0xff]
        %v1490 = vld [vmem:[#allocation8 + $0x40] sm:$0xff]
        %v1491 = vld [vmem:[#allocation8 + $0x48] sm:$0xff]
        %v1492 = vld [vmem:[#allocation8 + $0x50] sm:$0xff]
        %v1493 = vld [vmem:[#allocation8 + $0x58] sm:$0xff]
        %v1494 = vld [vmem:[#allocation8 + $0x60] sm:$0xff]
        %v1495 = vld [vmem:[#allocation8 + $0x68] sm:$0xff]
        %v1496 = vld [vmem:[#allocation8 + $0x70] sm:$0xff]
        %v1497 = vld [vmem:[#allocation8 + $0x78] sm:$0xff]
        %v1498 = vld [vmem:[#allocation8 + $0x80] sm:$0xff]
        %v1499 = vld [vmem:[#allocation8 + $0x88] sm:$0xff]
        %v1500 = vld [vmem:[#allocation8 + $0x90] sm:$0xff]
        %v1501 = vld [vmem:[#allocation8 + $0x98] sm:$0xff]
        %v1502 = vld [vmem:[#allocation8 + $0xa0] sm:$0xff]
        %v1503 = vld [vmem:[#allocation8 + $0xa8] sm:$0xff]
        %v1504 = vld [vmem:[#allocation8 + $0xb0] sm:$0xff]
        %v1505 = vld [vmem:[#allocation8 + $0xb8] sm:$0xff]
        %v1506 = vld [vmem:[#allocation8 + $0xc0] sm:$0xff]
        %v1507 = vld [vmem:[#allocation8 + $0xc8] sm:$0xff]
        %v1508 = vld [vmem:[#allocation8 + $0xd0] sm:$0xff]
        %v1509 = vld [vmem:[#allocation8 + $0xd8] sm:$0xff]
        %v1510 = vld [vmem:[#allocation8 + $0xe0] sm:$0xff]
        %v1511 = vld [vmem:[#allocation8 + $0xe8] sm:$0xff]
        %v1512 = vld [vmem:[#allocation8 + $0xf0] sm:$0xff]
        %v1513 = vld [vmem:[#allocation8 + $0xf8] sm:$0xff]
        %v1514 = vld [vmem:[%s4] sm:$0x3]
        %v1516 = vlaneseq
        %v1517 = vshrl.u32 %v1516, 7
        %v1518 = vsub.s32 0, %v1517
        %v1519 = vrot.slane %v1514, %v1518
        %v1520 = vlaneseq
        %v1521 = vshrl.u32 %v1520, 7
        %v1522 = vsub.s32 1, %v1521
        %v1523 = vrot.slane %v1514, %v1522
        %v1558 = vunpack.c.l.b16 %v1482
        %v1559 = vunpack.c.h.b16 %v1482
        %v1560 = vunpack.c.l.b16 %v1483
        %v1561 = vunpack.c.h.b16 %v1483
        %v1562 = vunpack.c.l.b16 %v1484
        %v1563 = vunpack.c.h.b16 %v1484
        %v1564 = vunpack.c.l.b16 %v1485
        %v1565 = vunpack.c.h.b16 %v1485
        %v1566 = vunpack.c.l.b16 %v1486
        %v1567 = vunpack.c.h.b16 %v1486
        %v1568 = vunpack.c.l.b16 %v1487
        %v1569 = vunpack.c.h.b16 %v1487
        %v1570 = vunpack.c.l.b16 %v1488
        %v1571 = vunpack.c.h.b16 %v1488
        %v1572 = vunpack.c.l.b16 %v1489
        %v1573 = vunpack.c.h.b16 %v1489
        %v1574 = vunpack.c.l.b16 %v1490
        %v1575 = vunpack.c.h.b16 %v1490
        %v1576 = vunpack.c.l.b16 %v1491
        %v1577 = vunpack.c.h.b16 %v1491
        %v1578 = vunpack.c.l.b16 %v1492
        %v1579 = vunpack.c.h.b16 %v1492
        %v1580 = vunpack.c.l.b16 %v1493
        %v1581 = vunpack.c.h.b16 %v1493
        %v1582 = vunpack.c.l.b16 %v1494
        %v1583 = vunpack.c.h.b16 %v1494
        %v1584 = vunpack.c.l.b16 %v1495
        %v1585 = vunpack.c.h.b16 %v1495
        %v1586 = vunpack.c.l.b16 %v1496
        %v1587 = vunpack.c.h.b16 %v1496
        %v1588 = vunpack.c.l.b16 %v1497
        %v1589 = vunpack.c.h.b16 %v1497
        %v1590 = vunpack.c.l.b16 %v1498
        %v1591 = vunpack.c.h.b16 %v1498
        %v1592 = vunpack.c.l.b16 %v1499
        %v1593 = vunpack.c.h.b16 %v1499
        %v1594 = vunpack.c.l.b16 %v1500
        %v1595 = vunpack.c.h.b16 %v1500
        %v1596 = vunpack.c.l.b16 %v1501
        %v1597 = vunpack.c.h.b16 %v1501
        %v1598 = vunpack.c.l.b16 %v1502
        %v1599 = vunpack.c.h.b16 %v1502
        %v1600 = vunpack.c.l.b16 %v1503
        %v1601 = vunpack.c.h.b16 %v1503
        %v1602 = vunpack.c.l.b16 %v1504
        %v1603 = vunpack.c.h.b16 %v1504
        %v1604 = vunpack.c.l.b16 %v1505
        %v1605 = vunpack.c.h.b16 %v1505
        %v1606 = vunpack.c.l.b16 %v1506
        %v1607 = vunpack.c.h.b16 %v1506
        %v1608 = vunpack.c.l.b16 %v1507
        %v1609 = vunpack.c.h.b16 %v1507
        %v1610 = vunpack.c.l.b16 %v1508
        %v1611 = vunpack.c.h.b16 %v1508
        %v1612 = vunpack.c.l.b16 %v1509
        %v1613 = vunpack.c.h.b16 %v1509
        %v1614 = vunpack.c.l.b16 %v1510
        %v1615 = vunpack.c.h.b16 %v1510
        %v1616 = vunpack.c.l.b16 %v1511
        %v1617 = vunpack.c.h.b16 %v1511
        %v1618 = vunpack.c.l.b16 %v1512
        %v1619 = vunpack.c.h.b16 %v1512
        %v1620 = vunpack.c.l.b16 %v1513
        %v1621 = vunpack.c.h.b16 %v1513
        %v1622 = vpack.c.b16 %v1560, %v1558
        %v1623 = vpack.c.b16 %v1561, %v1559
        %v1624 = vpack.c.b16 %v1564, %v1562
        %v1625 = vpack.c.b16 %v1565, %v1563
        %v1626 = vpack.c.b16 %v1568, %v1566
        %v1627 = vpack.c.b16 %v1569, %v1567
        %v1628 = vpack.c.b16 %v1572, %v1570
        %v1629 = vpack.c.b16 %v1573, %v1571
        %v1630 = vpack.c.b16 %v1576, %v1574
        %v1631 = vpack.c.b16 %v1577, %v1575
        %v1632 = vpack.c.b16 %v1580, %v1578
        %v1633 = vpack.c.b16 %v1581, %v1579
        %v1634 = vpack.c.b16 %v1584, %v1582
        %v1635 = vpack.c.b16 %v1585, %v1583
        %v1636 = vpack.c.b16 %v1588, %v1586
        %v1637 = vpack.c.b16 %v1589, %v1587
        %v1638 = vpack.c.b16 %v1592, %v1590
        %v1639 = vpack.c.b16 %v1593, %v1591
        %v1640 = vpack.c.b16 %v1596, %v1594
        %v1641 = vpack.c.b16 %v1597, %v1595
        %v1642 = vpack.c.b16 %v1600, %v1598
        %v1643 = vpack.c.b16 %v1601, %v1599
        %v1644 = vpack.c.b16 %v1604, %v1602
        %v1645 = vpack.c.b16 %v1605, %v1603
        %v1646 = vpack.c.b16 %v1608, %v1606
        %v1647 = vpack.c.b16 %v1609, %v1607
        %v1648 = vpack.c.b16 %v1612, %v1610
        %v1649 = vpack.c.b16 %v1613, %v1611
        %v1650 = vpack.c.b16 %v1616, %v1614
        %v1651 = vpack.c.b16 %v1617, %v1615
        %v1652 = vpack.c.b16 %v1620, %v1618
        %v1653 = vpack.c.b16 %v1621, %v1619
        %1686 = vmatprep.subr.bf16.mxu0 %v1623
        %1687 = vmatpush1.bf16.msra.mxu0 %v1622
        %1688 = vmatprep.subr.bf16.mxu0 %v1625
        %1689 = vmatpush1.bf16.msra.mxu0 %v1624
        %1690 = vmatprep.subr.bf16.mxu0 %v1627
        %1691 = vmatpush1.bf16.msra.mxu0 %v1626
        %1692 = vmatprep.subr.bf16.mxu0 %v1629
        %1693 = vmatpush1.bf16.msra.mxu0 %v1628
        %1694 = vmatprep.subr.bf16.mxu0 %v1631
        %1695 = vmatpush1.bf16.msra.mxu0 %v1630
        %1696 = vmatprep.subr.bf16.mxu0 %v1633
        %1697 = vmatpush1.bf16.msra.mxu0 %v1632
        %1698 = vmatprep.subr.bf16.mxu0 %v1635
        %1699 = vmatpush1.bf16.msra.mxu0 %v1634
        %1700 = vmatprep.subr.bf16.mxu0 %v1637
        %1701 = vmatpush1.bf16.msra.mxu0 %v1636
        %1702 = vmatprep.subr.bf16.mxu0 %v1639
        %1703 = vmatpush1.bf16.msra.mxu0 %v1638
        %1704 = vmatprep.subr.bf16.mxu0 %v1641
        %1705 = vmatpush1.bf16.msra.mxu0 %v1640
        %1706 = vmatprep.subr.bf16.mxu0 %v1643
        %1707 = vmatpush1.bf16.msra.mxu0 %v1642
        %1708 = vmatprep.subr.bf16.mxu0 %v1645
        %1709 = vmatpush1.bf16.msra.mxu0 %v1644
        %1710 = vmatprep.subr.bf16.mxu0 %v1647
        %1711 = vmatpush1.bf16.msra.mxu0 %v1646
        %1712 = vmatprep.subr.bf16.mxu0 %v1649
        %1713 = vmatpush1.bf16.msra.mxu0 %v1648
        %1714 = vmatprep.subr.bf16.mxu0 %v1651
        %1715 = vmatpush1.bf16.msra.mxu0 %v1650
        %1716 = vmatprep.subr.bf16.mxu0 %v1653
        %1717 = vmatpush1.bf16.msra.mxu0 %v1652
        %1718 = vmatprep.mubr.bf16.mxu0 %v1451
        %1719 = vmatmul.mubr.bf16.gmra.mrb[0].mxu0 %v1450
        %v1720 = vpop.f32.mrb[0].mxu0
        %v1721 = vadd.f32 %v1519, %v1720
        %v1722 = vpop.f32.mrb[0].mxu0
        %v1723 = vadd.f32 %v1523, %v1722
        %v1724 = vpop.f32.mrb[0].mxu0
        %v1725 = vadd.f32 %v1519, %v1724
        %v1726 = vpop.f32.mrb[0].mxu0
        %v1727 = vadd.f32 %v1523, %v1726
        %1728 = vmatprep.mubr.bf16.mxu0 %v1453
        %1729 = vmatmul.mubr.bf16.gmra.mrb[0].mxu0 %v1452
        %v1730 = vpop.f32.mrb[0].mxu0
        %v1731 = vadd.f32 %v1519, %v1730
        %v1732 = vpop.f32.mrb[0].mxu0
        %v1733 = vadd.f32 %v1523, %v1732
        %v1734 = vpop.f32.mrb[0].mxu0
        %v1735 = vadd.f32 %v1519, %v1734
        %v1736 = vpop.f32.mrb[0].mxu0
        %v1737 = vadd.f32 %v1523, %v1736
        %1738 = vmatprep.mubr.bf16.mxu0 %v1455
        %1739 = vmatmul.mubr.bf16.gmra.mrb[0].mxu0 %v1454
        %v1740 = vpop.f32.mrb[0].mxu0
        %v1741 = vadd.f32 %v1519, %v1740
        %v1742 = vpop.f32.mrb[0].mxu0
        %v1743 = vadd.f32 %v1523, %v1742
        %v1744 = vpop.f32.mrb[0].mxu0
        %v1745 = vadd.f32 %v1519, %v1744
        %v1746 = vpop.f32.mrb[0].mxu0
        %v1747 = vadd.f32 %v1523, %v1746
        %1748 = vmatprep.mubr.bf16.mxu0 %v1457
        %1749 = vmatmul.mubr.bf16.gmra.mrb[0].mxu0 %v1456
        %v1750 = vpop.f32.mrb[0].mxu0
        %v1751 = vadd.f32 %v1519, %v1750
        %v1752 = vpop.f32.mrb[0].mxu0
        %v1753 = vadd.f32 %v1523, %v1752
        %v1754 = vpop.f32.mrb[0].mxu0
        %v1755 = vadd.f32 %v1519, %v1754
        %v1756 = vpop.f32.mrb[0].mxu0
        %v1757 = vadd.f32 %v1523, %v1756
        %1758 = vmatprep.mubr.bf16.mxu0 %v1459
        %1759 = vmatmul.mubr.bf16.gmra.mrb[0].mxu0 %v1458
        %v1760 = vpop.f32.mrb[0].mxu0
        %v1761 = vadd.f32 %v1519, %v1760
        %v1762 = vpop.f32.mrb[0].mxu0
        %v1763 = vadd.f32 %v1523, %v1762
        %v1764 = vpop.f32.mrb[0].mxu0
        %v1765 = vadd.f32 %v1519, %v1764
        %v1766 = vpop.f32.mrb[0].mxu0
        %v1767 = vadd.f32 %v1523, %v1766
        %1768 = vmatprep.mubr.bf16.mxu0 %v1461
        %1769 = vmatmul.mubr.bf16.gmra.mrb[0].mxu0 %v1460
        %v1770 = vpop.f32.mrb[0].mxu0
        %v1771 = vadd.f32 %v1519, %v1770
        %v1772 = vpop.f32.mrb[0].mxu0
        %v1773 = vadd.f32 %v1523, %v1772
        %v1774 = vpop.f32.mrb[0].mxu0
        %v1775 = vadd.f32 %v1519, %v1774
        %v1776 = vpop.f32.mrb[0].mxu0
        %v1777 = vadd.f32 %v1523, %v1776
        %1778 = vmatprep.mubr.bf16.mxu0 %v1463
        %1779 = vmatmul.mubr.bf16.gmra.mrb[0].mxu0 %v1462
        %v1780 = vpop.f32.mrb[0].mxu0
        %v1781 = vadd.f32 %v1519, %v1780
        %v1782 = vpop.f32.mrb[0].mxu0
        %v1783 = vadd.f32 %v1523, %v1782
        %v1784 = vpop.f32.mrb[0].mxu0
        %v1785 = vadd.f32 %v1519, %v1784
        %v1786 = vpop.f32.mrb[0].mxu0
        %v1787 = vadd.f32 %v1523, %v1786
        %1788 = vmatprep.mubr.bf16.mxu0 %v1465
        %1789 = vmatmul.mubr.bf16.gmra.mrb[0].mxu0 %v1464
        %v1790 = vpop.f32.mrb[0].mxu0
        %v1791 = vadd.f32 %v1519, %v1790
        %v1792 = vpop.f32.mrb[0].mxu0
        %v1793 = vadd.f32 %v1523, %v1792
        %v1794 = vpop.f32.mrb[0].mxu0
        %v1795 = vadd.f32 %v1519, %v1794
        %v1796 = vpop.f32.mrb[0].mxu0
        %v1797 = vadd.f32 %v1523, %v1796
        %1798 = vmatprep.mubr.bf16.mxu0 %v1467
        %1799 = vmatmul.mubr.bf16.gmra.mrb[0].mxu0 %v1466
        %v1800 = vpop.f32.mrb[0].mxu0
        %v1801 = vadd.f32 %v1519, %v1800
        %v1802 = vpop.f32.mrb[0].mxu0
        %v1803 = vadd.f32 %v1523, %v1802
        %v1804 = vpop.f32.mrb[0].mxu0
        %v1805 = vadd.f32 %v1519, %v1804
        %v1806 = vpop.f32.mrb[0].mxu0
        %v1807 = vadd.f32 %v1523, %v1806
        %1808 = vmatprep.mubr.bf16.mxu0 %v1469
        %1809 = vmatmul.mubr.bf16.gmra.mrb[0].mxu0 %v1468
        %v1810 = vpop.f32.mrb[0].mxu0
        %v1811 = vadd.f32 %v1519, %v1810
        %v1812 = vpop.f32.mrb[0].mxu0
        %v1813 = vadd.f32 %v1523, %v1812
        %v1814 = vpop.f32.mrb[0].mxu0
        %v1815 = vadd.f32 %v1519, %v1814
        %v1816 = vpop.f32.mrb[0].mxu0
        %v1817 = vadd.f32 %v1523, %v1816
        %1818 = vmatprep.mubr.bf16.mxu0 %v1471
        %1819 = vmatmul.mubr.bf16.gmra.mrb[0].mxu0 %v1470
        %v1820 = vpop.f32.mrb[0].mxu0
        %v1821 = vadd.f32 %v1519, %v1820
        %v1822 = vpop.f32.mrb[0].mxu0
        %v1823 = vadd.f32 %v1523, %v1822
        %v1824 = vpop.f32.mrb[0].mxu0
        %v1825 = vadd.f32 %v1519, %v1824
        %v1826 = vpop.f32.mrb[0].mxu0
        %v1827 = vadd.f32 %v1523, %v1826
        %1828 = vmatprep.mubr.bf16.mxu0 %v1473
        %1829 = vmatmul.mubr.bf16.gmra.mrb[0].mxu0 %v1472
        %v1830 = vpop.f32.mrb[0].mxu0
        %v1831 = vadd.f32 %v1519, %v1830
        %v1832 = vpop.f32.mrb[0].mxu0
        %v1833 = vadd.f32 %v1523, %v1832
        %v1834 = vpop.f32.mrb[0].mxu0
        %v1835 = vadd.f32 %v1519, %v1834
        %v1836 = vpop.f32.mrb[0].mxu0
        %v1837 = vadd.f32 %v1523, %v1836
        %1838 = vmatprep.mubr.bf16.mxu0 %v1475
        %1839 = vmatmul.mubr.bf16.gmra.mrb[0].mxu0 %v1474
        %v1840 = vpop.f32.mrb[0].mxu0
        %v1841 = vadd.f32 %v1519, %v1840
        %v1842 = vpop.f32.mrb[0].mxu0
        %v1843 = vadd.f32 %v1523, %v1842
        %v1844 = vpop.f32.mrb[0].mxu0
        %v1845 = vadd.f32 %v1519, %v1844
        %v1846 = vpop.f32.mrb[0].mxu0
        %v1847 = vadd.f32 %v1523, %v1846
        %1848 = vmatprep.mubr.bf16.mxu0 %v1477
        %1849 = vmatmul.mubr.bf16.gmra.mrb[0].mxu0 %v1476
        %v1850 = vpop.f32.mrb[0].mxu0
        %v1851 = vadd.f32 %v1519, %v1850
        %v1852 = vpop.f32.mrb[0].mxu0
        %v1853 = vadd.f32 %v1523, %v1852
        %v1854 = vpop.f32.mrb[0].mxu0
        %v1855 = vadd.f32 %v1519, %v1854
        %v1856 = vpop.f32.mrb[0].mxu0
        %v1857 = vadd.f32 %v1523, %v1856
        %1858 = vmatprep.mubr.bf16.mxu0 %v1479
        %1859 = vmatmul.mubr.bf16.gmra.mrb[0].mxu0 %v1478
        %v1860 = vpop.f32.mrb[0].mxu0
        %v1861 = vadd.f32 %v1519, %v1860
        %v1862 = vpop.f32.mrb[0].mxu0
        %v1863 = vadd.f32 %v1523, %v1862
        %v1864 = vpop.f32.mrb[0].mxu0
        %v1865 = vadd.f32 %v1519, %v1864
        %v1866 = vpop.f32.mrb[0].mxu0
        %v1867 = vadd.f32 %v1523, %v1866
        %1868 = vmatprep.mubr.bf16.mxu0 %v1481
        %1869 = vmatmul.mubr.bf16.gmra.mrb[0].mxu0 %v1480
        %v1870 = vpop.f32.mrb[0].mxu0
        %v1871 = vadd.f32 %v1519, %v1870
        %v1872 = vpop.f32.mrb[0].mxu0
        %v1873 = vadd.f32 %v1523, %v1872
        %v1874 = vpop.f32.mrb[0].mxu0
        %v1875 = vadd.f32 %v1519, %v1874
        %v1876 = vpop.f32.mrb[0].mxu0
        %v1877 = vadd.f32 %v1523, %v1876
        %1878 = vdwg.mxu0
        %v1879 = vmax.f32 %v1721, 0.0
        %v1880 = vmax.f32 %v1723, 0.0
        %v1881 = vmax.f32 %v1725, 0.0
        %v1882 = vmax.f32 %v1727, 0.0
        %v1883 = vmax.f32 %v1731, 0.0
        %v1884 = vmax.f32 %v1733, 0.0
        %v1885 = vmax.f32 %v1735, 0.0
        %v1886 = vmax.f32 %v1737, 0.0
        %v1887 = vmax.f32 %v1741, 0.0
        %v1888 = vmax.f32 %v1743, 0.0
        %v1889 = vmax.f32 %v1745, 0.0
        %v1890 = vmax.f32 %v1747, 0.0
        %v1891 = vmax.f32 %v1751, 0.0
        %v1892 = vmax.f32 %v1753, 0.0
        %v1893 = vmax.f32 %v1755, 0.0
        %v1894 = vmax.f32 %v1757, 0.0
        %v1895 = vmax.f32 %v1761, 0.0
        %v1896 = vmax.f32 %v1763, 0.0
        %v1897 = vmax.f32 %v1765, 0.0
        %v1898 = vmax.f32 %v1767, 0.0
        %v1899 = vmax.f32 %v1771, 0.0
        %v1900 = vmax.f32 %v1773, 0.0
        %v1901 = vmax.f32 %v1775, 0.0
        %v1902 = vmax.f32 %v1777, 0.0
        %v1903 = vmax.f32 %v1781, 0.0
        %v1904 = vmax.f32 %v1783, 0.0
        %v1905 = vmax.f32 %v1785, 0.0
        %v1906 = vmax.f32 %v1787, 0.0
        %v1907 = vmax.f32 %v1791, 0.0
        %v1908 = vmax.f32 %v1793, 0.0
        %v1909 = vmax.f32 %v1795, 0.0
        %v1910 = vmax.f32 %v1797, 0.0
        %v1911 = vmax.f32 %v1801, 0.0
        %v1912 = vmax.f32 %v1803, 0.0
        %v1913 = vmax.f32 %v1805, 0.0
        %v1914 = vmax.f32 %v1807, 0.0
        %v1915 = vmax.f32 %v1811, 0.0
        %v1916 = vmax.f32 %v1813, 0.0
        %v1917 = vmax.f32 %v1815, 0.0
        %v1918 = vmax.f32 %v1817, 0.0
        %v1919 = vmax.f32 %v1821, 0.0
        %v1920 = vmax.f32 %v1823, 0.0
        %v1921 = vmax.f32 %v1825, 0.0
        %v1922 = vmax.f32 %v1827, 0.0
        %v1923 = vmax.f32 %v1831, 0.0
        %v1924 = vmax.f32 %v1833, 0.0
        %v1925 = vmax.f32 %v1835, 0.0
        %v1926 = vmax.f32 %v1837, 0.0
        %v1927 = vmax.f32 %v1841, 0.0
        %v1928 = vmax.f32 %v1843, 0.0
        %v1929 = vmax.f32 %v1845, 0.0
        %v1930 = vmax.f32 %v1847, 0.0
        %v1931 = vmax.f32 %v1851, 0.0
        %v1932 = vmax.f32 %v1853, 0.0
        %v1933 = vmax.f32 %v1855, 0.0
        %v1934 = vmax.f32 %v1857, 0.0
        %v1935 = vmax.f32 %v1861, 0.0
        %v1936 = vmax.f32 %v1863, 0.0
        %v1937 = vmax.f32 %v1865, 0.0
        %v1938 = vmax.f32 %v1867, 0.0
        %v1939 = vmax.f32 %v1871, 0.0
        %v1940 = vmax.f32 %v1873, 0.0
        %v1941 = vmax.f32 %v1875, 0.0
        %v1942 = vmax.f32 %v1877, 0.0
        %v1943 = vpack.c.bf16 %v1881, %v1879
        %v1944 = vpack.c.bf16 %v1882, %v1880
        %v1945 = vpack.c.bf16 %v1885, %v1883
        %v1946 = vpack.c.bf16 %v1886, %v1884
        %v1947 = vpack.c.bf16 %v1889, %v1887
        %v1948 = vpack.c.bf16 %v1890, %v1888
        %v1949 = vpack.c.bf16 %v1893, %v1891
        %v1950 = vpack.c.bf16 %v1894, %v1892
        %v1951 = vpack.c.bf16 %v1897, %v1895
        %v1952 = vpack.c.bf16 %v1898, %v1896
        %v1953 = vpack.c.bf16 %v1901, %v1899
        %v1954 = vpack.c.bf16 %v1902, %v1900
        %v1955 = vpack.c.bf16 %v1905, %v1903
        %v1956 = vpack.c.bf16 %v1906, %v1904
        %v1957 = vpack.c.bf16 %v1909, %v1907
        %v1958 = vpack.c.bf16 %v1910, %v1908
        %v1959 = vpack.c.bf16 %v1913, %v1911
        %v1960 = vpack.c.bf16 %v1914, %v1912
        %v1961 = vpack.c.bf16 %v1917, %v1915
        %v1962 = vpack.c.bf16 %v1918, %v1916
        %v1963 = vpack.c.bf16 %v1921, %v1919
        %v1964 = vpack.c.bf16 %v1922, %v1920
        %v1965 = vpack.c.bf16 %v1925, %v1923
        %v1966 = vpack.c.bf16 %v1926, %v1924
        %v1967 = vpack.c.bf16 %v1929, %v1927
        %v1968 = vpack.c.bf16 %v1930, %v1928
        %v1969 = vpack.c.bf16 %v1933, %v1931
        %v1970 = vpack.c.bf16 %v1934, %v1932
        %v1971 = vpack.c.bf16 %v1937, %v1935
        %v1972 = vpack.c.bf16 %v1938, %v1936
        %v1973 = vpack.c.bf16 %v1941, %v1939
        %v1974 = vpack.c.bf16 %v1942, %v1940
        %v1975 = vld [vmem:[#allocation9] sm:$0xff]
        %v1976 = vld [vmem:[#allocation9 + $0x8] sm:$0xff]
        %v1977 = vld [vmem:[#allocation9 + $0x10] sm:$0xff]
        %v1978 = vld [vmem:[#allocation9 + $0x18] sm:$0xff]
        %v1979 = vld [vmem:[#allocation9 + $0x20] sm:$0xff]
        %v1980 = vld [vmem:[#allocation9 + $0x28] sm:$0xff]
        %v1981 = vld [vmem:[#allocation9 + $0x30] sm:$0xff]
        %v1982 = vld [vmem:[#allocation9 + $0x38] sm:$0xff]
        %v1983 = vld [vmem:[#allocation9 + $0x40] sm:$0xff]
        %v1984 = vld [vmem:[#allocation9 + $0x48] sm:$0xff]
        %v1985 = vld [vmem:[#allocation9 + $0x50] sm:$0xff]
        %v1986 = vld [vmem:[#allocation9 + $0x58] sm:$0xff]
        %v1987 = vld [vmem:[#allocation9 + $0x60] sm:$0xff]
        %v1988 = vld [vmem:[#allocation9 + $0x68] sm:$0xff]
        %v1989 = vld [vmem:[#allocation9 + $0x70] sm:$0xff]
        %v1990 = vld [vmem:[#allocation9 + $0x78] sm:$0xff]
        %v1991 = vld [vmem:[#allocation9 + $0x80] sm:$0xff]
        %v1992 = vld [vmem:[#allocation9 + $0x88] sm:$0xff]
        %v1993 = vld [vmem:[#allocation9 + $0x90] sm:$0xff]
        %v1994 = vld [vmem:[#allocation9 + $0x98] sm:$0xff]
        %v1995 = vld [vmem:[#allocation9 + $0xa0] sm:$0xff]
        %v1996 = vld [vmem:[#allocation9 + $0xa8] sm:$0xff]
        %v1997 = vld [vmem:[#allocation9 + $0xb0] sm:$0xff]
        %v1998 = vld [vmem:[#allocation9 + $0xb8] sm:$0xff]
        %v1999 = vld [vmem:[#allocation9 + $0xc0] sm:$0xff]
        %v2000 = vld [vmem:[#allocation9 + $0xc8] sm:$0xff]
        %v2001 = vld [vmem:[#allocation9 + $0xd0] sm:$0xff]
        %v2002 = vld [vmem:[#allocation9 + $0xd8] sm:$0xff]
        %v2003 = vld [vmem:[#allocation9 + $0xe0] sm:$0xff]
        %v2004 = vld [vmem:[#allocation9 + $0xe8] sm:$0xff]
        %v2005 = vld [vmem:[#allocation9 + $0xf0] sm:$0xff]
        %v2006 = vld [vmem:[#allocation9 + $0xf8] sm:$0xff]
        %v2007 = vld [vmem:[%s6] sm:$0x3]
        %v2009 = vlaneseq
        %v2010 = vshrl.u32 %v2009, 7
        %v2011 = vsub.s32 0, %v2010
        %v2012 = vrot.slane %v2007, %v2011
        %v2013 = vlaneseq
        %v2014 = vshrl.u32 %v2013, 7
        %v2015 = vsub.s32 1, %v2014
        %v2016 = vrot.slane %v2007, %v2015
        %v2051 = vunpack.c.l.b16 %v1975
        %v2052 = vunpack.c.h.b16 %v1975
        %v2053 = vunpack.c.l.b16 %v1976
        %v2054 = vunpack.c.h.b16 %v1976
        %v2055 = vunpack.c.l.b16 %v1977
        %v2056 = vunpack.c.h.b16 %v1977
        %v2057 = vunpack.c.l.b16 %v1978
        %v2058 = vunpack.c.h.b16 %v1978
        %v2059 = vunpack.c.l.b16 %v1979
        %v2060 = vunpack.c.h.b16 %v1979
        %v2061 = vunpack.c.l.b16 %v1980
        %v2062 = vunpack.c.h.b16 %v1980
        %v2063 = vunpack.c.l.b16 %v1981
        %v2064 = vunpack.c.h.b16 %v1981
        %v2065 = vunpack.c.l.b16 %v1982
        %v2066 = vunpack.c.h.b16 %v1982
        %v2067 = vunpack.c.l.b16 %v1983
        %v2068 = vunpack.c.h.b16 %v1983
        %v2069 = vunpack.c.l.b16 %v1984
        %v2070 = vunpack.c.h.b16 %v1984
        %v2071 = vunpack.c.l.b16 %v1985
        %v2072 = vunpack.c.h.b16 %v1985
        %v2073 = vunpack.c.l.b16 %v1986
        %v2074 = vunpack.c.h.b16 %v1986
        %v2075 = vunpack.c.l.b16 %v1987
        %v2076 = vunpack.c.h.b16 %v1987
        %v2077 = vunpack.c.l.b16 %v1988
        %v2078 = vunpack.c.h.b16 %v1988
        %v2079 = vunpack.c.l.b16 %v1989
        %v2080 = vunpack.c.h.b16 %v1989
        %v2081 = vunpack.c.l.b16 %v1990
        %v2082 = vunpack.c.h.b16 %v1990
        %v2083 = vunpack.c.l.b16 %v1991
        %v2084 = vunpack.c.h.b16 %v1991
        %v2085 = vunpack.c.l.b16 %v1992
        %v2086 = vunpack.c.h.b16 %v1992
        %v2087 = vunpack.c.l.b16 %v1993
        %v2088 = vunpack.c.h.b16 %v1993
        %v2089 = vunpack.c.l.b16 %v1994
        %v2090 = vunpack.c.h.b16 %v1994
        %v2091 = vunpack.c.l.b16 %v1995
        %v2092 = vunpack.c.h.b16 %v1995
        %v2093 = vunpack.c.l.b16 %v1996
        %v2094 = vunpack.c.h.b16 %v1996
        %v2095 = vunpack.c.l.b16 %v1997
        %v2096 = vunpack.c.h.b16 %v1997
        %v2097 = vunpack.c.l.b16 %v1998
        %v2098 = vunpack.c.h.b16 %v1998
        %v2099 = vunpack.c.l.b16 %v1999
        %v2100 = vunpack.c.h.b16 %v1999
        %v2101 = vunpack.c.l.b16 %v2000
        %v2102 = vunpack.c.h.b16 %v2000
        %v2103 = vunpack.c.l.b16 %v2001
        %v2104 = vunpack.c.h.b16 %v2001
        %v2105 = vunpack.c.l.b16 %v2002
        %v2106 = vunpack.c.h.b16 %v2002
        %v2107 = vunpack.c.l.b16 %v2003
        %v2108 = vunpack.c.h.b16 %v2003
        %v2109 = vunpack.c.l.b16 %v2004
        %v2110 = vunpack.c.h.b16 %v2004
        %v2111 = vunpack.c.l.b16 %v2005
        %v2112 = vunpack.c.h.b16 %v2005
        %v2113 = vunpack.c.l.b16 %v2006
        %v2114 = vunpack.c.h.b16 %v2006
        %v2115 = vpack.c.b16 %v2053, %v2051
        %v2116 = vpack.c.b16 %v2054, %v2052
        %v2117 = vpack.c.b16 %v2057, %v2055
        %v2118 = vpack.c.b16 %v2058, %v2056
        %v2119 = vpack.c.b16 %v2061, %v2059
        %v2120 = vpack.c.b16 %v2062, %v2060
        %v2121 = vpack.c.b16 %v2065, %v2063
        %v2122 = vpack.c.b16 %v2066, %v2064
        %v2123 = vpack.c.b16 %v2069, %v2067
        %v2124 = vpack.c.b16 %v2070, %v2068
        %v2125 = vpack.c.b16 %v2073, %v2071
        %v2126 = vpack.c.b16 %v2074, %v2072
        %v2127 = vpack.c.b16 %v2077, %v2075
        %v2128 = vpack.c.b16 %v2078, %v2076
        %v2129 = vpack.c.b16 %v2081, %v2079
        %v2130 = vpack.c.b16 %v2082, %v2080
        %v2131 = vpack.c.b16 %v2085, %v2083
        %v2132 = vpack.c.b16 %v2086, %v2084
        %v2133 = vpack.c.b16 %v2089, %v2087
        %v2134 = vpack.c.b16 %v2090, %v2088
        %v2135 = vpack.c.b16 %v2093, %v2091
        %v2136 = vpack.c.b16 %v2094, %v2092
        %v2137 = vpack.c.b16 %v2097, %v2095
        %v2138 = vpack.c.b16 %v2098, %v2096
        %v2139 = vpack.c.b16 %v2101, %v2099
        %v2140 = vpack.c.b16 %v2102, %v2100
        %v2141 = vpack.c.b16 %v2105, %v2103
        %v2142 = vpack.c.b16 %v2106, %v2104
        %v2143 = vpack.c.b16 %v2109, %v2107
        %v2144 = vpack.c.b16 %v2110, %v2108
        %v2145 = vpack.c.b16 %v2113, %v2111
        %v2146 = vpack.c.b16 %v2114, %v2112
        %2179 = vmatprep.subr.bf16.mxu0 %v2116
        %2180 = vmatpush1.bf16.msra.mxu0 %v2115
        %2181 = vmatprep.subr.bf16.mxu0 %v2118
        %2182 = vmatpush1.bf16.msra.mxu0 %v2117
        %2183 = vmatprep.subr.bf16.mxu0 %v2120
        %2184 = vmatpush1.bf16.msra.mxu0 %v2119
        %2185 = vmatprep.subr.bf16.mxu0 %v2122
        %2186 = vmatpush1.bf16.msra.mxu0 %v2121
        %2187 = vmatprep.subr.bf16.mxu0 %v2124
        %2188 = vmatpush1.bf16.msra.mxu0 %v2123
        %2189 = vmatprep.subr.bf16.mxu0 %v2126
        %2190 = vmatpush1.bf16.msra.mxu0 %v2125
        %2191 = vmatprep.subr.bf16.mxu0 %v2128
        %2192 = vmatpush1.bf16.msra.mxu0 %v2127
        %2193 = vmatprep.subr.bf16.mxu0 %v2130
        %2194 = vmatpush1.bf16.msra.mxu0 %v2129
        %2195 = vmatprep.subr.bf16.mxu0 %v2132
        %2196 = vmatpush1.bf16.msra.mxu0 %v2131
        %2197 = vmatprep.subr.bf16.mxu0 %v2134
        %2198 = vmatpush1.bf16.msra.mxu0 %v2133
        %2199 = vmatprep.subr.bf16.mxu0 %v2136
        %2200 = vmatpush1.bf16.msra.mxu0 %v2135
        %2201 = vmatprep.subr.bf16.mxu0 %v2138
        %2202 = vmatpush1.bf16.msra.mxu0 %v2137
        %2203 = vmatprep.subr.bf16.mxu0 %v2140
        %2204 = vmatpush1.bf16.msra.mxu0 %v2139
        %2205 = vmatprep.subr.bf16.mxu0 %v2142
        %2206 = vmatpush1.bf16.msra.mxu0 %v2141
        %2207 = vmatprep.subr.bf16.mxu0 %v2144
        %2208 = vmatpush1.bf16.msra.mxu0 %v2143
        %2209 = vmatprep.subr.bf16.mxu0 %v2146
        %2210 = vmatpush1.bf16.msra.mxu0 %v2145
        %2211 = vmatprep.mubr.bf16.mxu0 %v1944
        %2212 = vmatmul.mubr.bf16.gmra.mrb[0].mxu0 %v1943
        %v2213 = vpop.f32.mrb[0].mxu0
        %v2214 = vadd.f32 %v2012, %v2213
        %v2215 = vpop.f32.mrb[0].mxu0
        %v2216 = vadd.f32 %v2016, %v2215
        %v2217 = vpop.f32.mrb[0].mxu0
        %v2218 = vadd.f32 %v2012, %v2217
        %v2219 = vpop.f32.mrb[0].mxu0
        %v2220 = vadd.f32 %v2016, %v2219
        %2221 = vmatprep.mubr.bf16.mxu0 %v1946
        %2222 = vmatmul.mubr.bf16.gmra.mrb[0].mxu0 %v1945
        %v2223 = vpop.f32.mrb[0].mxu0
        %v2224 = vadd.f32 %v2012, %v2223
        %v2225 = vpop.f32.mrb[0].mxu0
        %v2226 = vadd.f32 %v2016, %v2225
        %v2227 = vpop.f32.mrb[0].mxu0
        %v2228 = vadd.f32 %v2012, %v2227
        %v2229 = vpop.f32.mrb[0].mxu0
        %v2230 = vadd.f32 %v2016, %v2229
        %2231 = vmatprep.mubr.bf16.mxu0 %v1948
        %2232 = vmatmul.mubr.bf16.gmra.mrb[0].mxu0 %v1947
        %v2233 = vpop.f32.mrb[0].mxu0
        %v2234 = vadd.f32 %v2012, %v2233
        %v2235 = vpop.f32.mrb[0].mxu0
        %v2236 = vadd.f32 %v2016, %v2235
        %v2237 = vpop.f32.mrb[0].mxu0
        %v2238 = vadd.f32 %v2012, %v2237
        %v2239 = vpop.f32.mrb[0].mxu0
        %v2240 = vadd.f32 %v2016, %v2239
        %2241 = vmatprep.mubr.bf16.mxu0 %v1950
        %2242 = vmatmul.mubr.bf16.gmra.mrb[0].mxu0 %v1949
        %v2243 = vpop.f32.mrb[0].mxu0
        %v2244 = vadd.f32 %v2012, %v2243
        %v2245 = vpop.f32.mrb[0].mxu0
        %v2246 = vadd.f32 %v2016, %v2245
        %v2247 = vpop.f32.mrb[0].mxu0
        %v2248 = vadd.f32 %v2012, %v2247
        %v2249 = vpop.f32.mrb[0].mxu0
        %v2250 = vadd.f32 %v2016, %v2249
        %2251 = vmatprep.mubr.bf16.mxu0 %v1952
        %2252 = vmatmul.mubr.bf16.gmra.mrb[0].mxu0 %v1951
        %v2253 = vpop.f32.mrb[0].mxu0
        %v2254 = vadd.f32 %v2012, %v2253
        %v2255 = vpop.f32.mrb[0].mxu0
        %v2256 = vadd.f32 %v2016, %v2255
        %v2257 = vpop.f32.mrb[0].mxu0
        %v2258 = vadd.f32 %v2012, %v2257
        %v2259 = vpop.f32.mrb[0].mxu0
        %v2260 = vadd.f32 %v2016, %v2259
        %2261 = vmatprep.mubr.bf16.mxu0 %v1954
        %2262 = vmatmul.mubr.bf16.gmra.mrb[0].mxu0 %v1953
        %v2263 = vpop.f32.mrb[0].mxu0
        %v2264 = vadd.f32 %v2012, %v2263
        %v2265 = vpop.f32.mrb[0].mxu0
        %v2266 = vadd.f32 %v2016, %v2265
        %v2267 = vpop.f32.mrb[0].mxu0
        %v2268 = vadd.f32 %v2012, %v2267
        %v2269 = vpop.f32.mrb[0].mxu0
        %v2270 = vadd.f32 %v2016, %v2269
        %2271 = vmatprep.mubr.bf16.mxu0 %v1956
        %2272 = vmatmul.mubr.bf16.gmra.mrb[0].mxu0 %v1955
        %v2273 = vpop.f32.mrb[0].mxu0
        %v2274 = vadd.f32 %v2012, %v2273
        %v2275 = vpop.f32.mrb[0].mxu0
        %v2276 = vadd.f32 %v2016, %v2275
        %v2277 = vpop.f32.mrb[0].mxu0
        %v2278 = vadd.f32 %v2012, %v2277
        %v2279 = vpop.f32.mrb[0].mxu0
        %v2280 = vadd.f32 %v2016, %v2279
        %2281 = vmatprep.mubr.bf16.mxu0 %v1958
        %2282 = vmatmul.mubr.bf16.gmra.mrb[0].mxu0 %v1957
        %v2283 = vpop.f32.mrb[0].mxu0
        %v2284 = vadd.f32 %v2012, %v2283
        %v2285 = vpop.f32.mrb[0].mxu0
        %v2286 = vadd.f32 %v2016, %v2285
        %v2287 = vpop.f32.mrb[0].mxu0
        %v2288 = vadd.f32 %v2012, %v2287
        %v2289 = vpop.f32.mrb[0].mxu0
        %v2290 = vadd.f32 %v2016, %v2289
        %2291 = vmatprep.mubr.bf16.mxu0 %v1960
        %2292 = vmatmul.mubr.bf16.gmra.mrb[0].mxu0 %v1959
        %v2293 = vpop.f32.mrb[0].mxu0
        %v2294 = vadd.f32 %v2012, %v2293
        %v2295 = vpop.f32.mrb[0].mxu0
        %v2296 = vadd.f32 %v2016, %v2295
        %v2297 = vpop.f32.mrb[0].mxu0
        %v2298 = vadd.f32 %v2012, %v2297
        %v2299 = vpop.f32.mrb[0].mxu0
        %v2300 = vadd.f32 %v2016, %v2299
        %2301 = vmatprep.mubr.bf16.mxu0 %v1962
        %2302 = vmatmul.mubr.bf16.gmra.mrb[0].mxu0 %v1961
        %v2303 = vpop.f32.mrb[0].mxu0
        %v2304 = vadd.f32 %v2012, %v2303
        %v2305 = vpop.f32.mrb[0].mxu0
        %v2306 = vadd.f32 %v2016, %v2305
        %v2307 = vpop.f32.mrb[0].mxu0
        %v2308 = vadd.f32 %v2012, %v2307
        %v2309 = vpop.f32.mrb[0].mxu0
        %v2310 = vadd.f32 %v2016, %v2309
        %2311 = vmatprep.mubr.bf16.mxu0 %v1964
        %2312 = vmatmul.mubr.bf16.gmra.mrb[0].mxu0 %v1963
        %v2313 = vpop.f32.mrb[0].mxu0
        %v2314 = vadd.f32 %v2012, %v2313
        %v2315 = vpop.f32.mrb[0].mxu0
        %v2316 = vadd.f32 %v2016, %v2315
        %v2317 = vpop.f32.mrb[0].mxu0
        %v2318 = vadd.f32 %v2012, %v2317
        %v2319 = vpop.f32.mrb[0].mxu0
        %v2320 = vadd.f32 %v2016, %v2319
        %2321 = vmatprep.mubr.bf16.mxu0 %v1966
        %2322 = vmatmul.mubr.bf16.gmra.mrb[0].mxu0 %v1965
        %v2323 = vpop.f32.mrb[0].mxu0
        %v2324 = vadd.f32 %v2012, %v2323
        %v2325 = vpop.f32.mrb[0].mxu0
        %v2326 = vadd.f32 %v2016, %v2325
        %v2327 = vpop.f32.mrb[0].mxu0
        %v2328 = vadd.f32 %v2012, %v2327
        %v2329 = vpop.f32.mrb[0].mxu0
        %v2330 = vadd.f32 %v2016, %v2329
        %2331 = vmatprep.mubr.bf16.mxu0 %v1968
        %2332 = vmatmul.mubr.bf16.gmra.mrb[0].mxu0 %v1967
        %v2333 = vpop.f32.mrb[0].mxu0
        %v2334 = vadd.f32 %v2012, %v2333
        %v2335 = vpop.f32.mrb[0].mxu0
        %v2336 = vadd.f32 %v2016, %v2335
        %v2337 = vpop.f32.mrb[0].mxu0
        %v2338 = vadd.f32 %v2012, %v2337
        %v2339 = vpop.f32.mrb[0].mxu0
        %v2340 = vadd.f32 %v2016, %v2339
        %2341 = vmatprep.mubr.bf16.mxu0 %v1970
        %2342 = vmatmul.mubr.bf16.gmra.mrb[0].mxu0 %v1969
        %v2343 = vpop.f32.mrb[0].mxu0
        %v2344 = vadd.f32 %v2012, %v2343
        %v2345 = vpop.f32.mrb[0].mxu0
        %v2346 = vadd.f32 %v2016, %v2345
        %v2347 = vpop.f32.mrb[0].mxu0
        %v2348 = vadd.f32 %v2012, %v2347
        %v2349 = vpop.f32.mrb[0].mxu0
        %v2350 = vadd.f32 %v2016, %v2349
        %2351 = vmatprep.mubr.bf16.mxu0 %v1972
        %2352 = vmatmul.mubr.bf16.gmra.mrb[0].mxu0 %v1971
        %v2353 = vpop.f32.mrb[0].mxu0
        %v2354 = vadd.f32 %v2012, %v2353
        %v2355 = vpop.f32.mrb[0].mxu0
        %v2356 = vadd.f32 %v2016, %v2355
        %v2357 = vpop.f32.mrb[0].mxu0
        %v2358 = vadd.f32 %v2012, %v2357
        %v2359 = vpop.f32.mrb[0].mxu0
        %v2360 = vadd.f32 %v2016, %v2359
        %2361 = vmatprep.mubr.bf16.mxu0 %v1974
        %2362 = vmatmul.mubr.bf16.gmra.mrb[0].mxu0 %v1973
        %v2363 = vpop.f32.mrb[0].mxu0
        %v2364 = vadd.f32 %v2012, %v2363
        %v2365 = vpop.f32.mrb[0].mxu0
        %v2366 = vadd.f32 %v2016, %v2365
        %v2367 = vpop.f32.mrb[0].mxu0
        %v2368 = vadd.f32 %v2012, %v2367
        %v2369 = vpop.f32.mrb[0].mxu0
        %v2370 = vadd.f32 %v2016, %v2369
        %2371 = vdwg.mxu0
        %v2372 = vmax.f32 %v2214, 0.0
        %v2373 = vmax.f32 %v2216, 0.0
        %v2374 = vmax.f32 %v2218, 0.0
        %v2375 = vmax.f32 %v2220, 0.0
        %v2376 = vmax.f32 %v2224, 0.0
        %v2377 = vmax.f32 %v2226, 0.0
        %v2378 = vmax.f32 %v2228, 0.0
        %v2379 = vmax.f32 %v2230, 0.0
        %v2380 = vmax.f32 %v2234, 0.0
        %v2381 = vmax.f32 %v2236, 0.0
        %v2382 = vmax.f32 %v2238, 0.0
        %v2383 = vmax.f32 %v2240, 0.0
        %v2384 = vmax.f32 %v2244, 0.0
        %v2385 = vmax.f32 %v2246, 0.0
        %v2386 = vmax.f32 %v2248, 0.0
        %v2387 = vmax.f32 %v2250, 0.0
        %v2388 = vmax.f32 %v2254, 0.0
        %v2389 = vmax.f32 %v2256, 0.0
        %v2390 = vmax.f32 %v2258, 0.0
        %v2391 = vmax.f32 %v2260, 0.0
        %v2392 = vmax.f32 %v2264, 0.0
        %v2393 = vmax.f32 %v2266, 0.0
        %v2394 = vmax.f32 %v2268, 0.0
        %v2395 = vmax.f32 %v2270, 0.0
        %v2396 = vmax.f32 %v2274, 0.0
        %v2397 = vmax.f32 %v2276, 0.0
        %v2398 = vmax.f32 %v2278, 0.0
        %v2399 = vmax.f32 %v2280, 0.0
        %v2400 = vmax.f32 %v2284, 0.0
        %v2401 = vmax.f32 %v2286, 0.0
        %v2402 = vmax.f32 %v2288, 0.0
        %v2403 = vmax.f32 %v2290, 0.0
        %v2404 = vmax.f32 %v2294, 0.0
        %v2405 = vmax.f32 %v2296, 0.0
        %v2406 = vmax.f32 %v2298, 0.0
        %v2407 = vmax.f32 %v2300, 0.0
        %v2408 = vmax.f32 %v2304, 0.0
        %v2409 = vmax.f32 %v2306, 0.0
        %v2410 = vmax.f32 %v2308, 0.0
        %v2411 = vmax.f32 %v2310, 0.0
        %v2412 = vmax.f32 %v2314, 0.0
        %v2413 = vmax.f32 %v2316, 0.0
        %v2414 = vmax.f32 %v2318, 0.0
        %v2415 = vmax.f32 %v2320, 0.0
        %v2416 = vmax.f32 %v2324, 0.0
        %v2417 = vmax.f32 %v2326, 0.0
        %v2418 = vmax.f32 %v2328, 0.0
        %v2419 = vmax.f32 %v2330, 0.0
        %v2420 = vmax.f32 %v2334, 0.0
        %v2421 = vmax.f32 %v2336, 0.0
        %v2422 = vmax.f32 %v2338, 0.0
        %v2423 = vmax.f32 %v2340, 0.0
        %v2424 = vmax.f32 %v2344, 0.0
        %v2425 = vmax.f32 %v2346, 0.0
        %v2426 = vmax.f32 %v2348, 0.0
        %v2427 = vmax.f32 %v2350, 0.0
        %v2428 = vmax.f32 %v2354, 0.0
        %v2429 = vmax.f32 %v2356, 0.0
        %v2430 = vmax.f32 %v2358, 0.0
        %v2431 = vmax.f32 %v2360, 0.0
        %v2432 = vmax.f32 %v2364, 0.0
        %v2433 = vmax.f32 %v2366, 0.0
        %v2434 = vmax.f32 %v2368, 0.0
        %v2435 = vmax.f32 %v2370, 0.0
        %v2436 = vld [vmem:[%s7] sm:$0x3]
        %v2438 = vlaneseq
        %v2439 = vshrl.u32 %v2438, 7
        %v2440 = vsub.s32 0, %v2439
        %v2441 = vrot.slane %v2436, %v2440
        %v2442 = vlaneseq
        %v2443 = vshrl.u32 %v2442, 7
        %v2444 = vsub.s32 1, %v2443
        %v2445 = vrot.slane %v2436, %v2444
        %v2448 = vmul.f32 %v2372, %v2441
        %v2449 = vmul.f32 %v2373, %v2445
        %v2450 = vmul.f32 %v2374, %v2441
        %v2451 = vmul.f32 %v2375, %v2445
        %v2452 = vmul.f32 %v2376, %v2441
        %v2453 = vmul.f32 %v2377, %v2445
        %v2454 = vmul.f32 %v2378, %v2441
        %v2455 = vmul.f32 %v2379, %v2445
        %v2456 = vmul.f32 %v2380, %v2441
        %v2457 = vmul.f32 %v2381, %v2445
        %v2458 = vmul.f32 %v2382, %v2441
        %v2459 = vmul.f32 %v2383, %v2445
        %v2460 = vmul.f32 %v2384, %v2441
        %v2461 = vmul.f32 %v2385, %v2445
        %v2462 = vmul.f32 %v2386, %v2441
        %v2463 = vmul.f32 %v2387, %v2445
        %v2464 = vmul.f32 %v2388, %v2441
        %v2465 = vmul.f32 %v2389, %v2445
        %v2466 = vmul.f32 %v2390, %v2441
        %v2467 = vmul.f32 %v2391, %v2445
        %v2468 = vmul.f32 %v2392, %v2441
        %v2469 = vmul.f32 %v2393, %v2445
        %v2470 = vmul.f32 %v2394, %v2441
        %v2471 = vmul.f32 %v2395, %v2445
        %v2472 = vmul.f32 %v2396, %v2441
        %v2473 = vmul.f32 %v2397, %v2445
        %v2474 = vmul.f32 %v2398, %v2441
        %v2475 = vmul.f32 %v2399, %v2445
        %v2476 = vmul.f32 %v2400, %v2441
        %v2477 = vmul.f32 %v2401, %v2445
        %v2478 = vmul.f32 %v2402, %v2441
        %v2479 = vmul.f32 %v2403, %v2445
        %v2480 = vmul.f32 %v2404, %v2441
        %v2481 = vmul.f32 %v2405, %v2445
        %v2482 = vmul.f32 %v2406, %v2441
        %v2483 = vmul.f32 %v2407, %v2445
        %v2484 = vmul.f32 %v2408, %v2441
        %v2485 = vmul.f32 %v2409, %v2445
        %v2486 = vmul.f32 %v2410, %v2441
        %v2487 = vmul.f32 %v2411, %v2445
        %v2488 = vmul.f32 %v2412, %v2441
        %v2489 = vmul.f32 %v2413, %v2445
        %v2490 = vmul.f32 %v2414, %v2441
        %v2491 = vmul.f32 %v2415, %v2445
        %v2492 = vmul.f32 %v2416, %v2441
        %v2493 = vmul.f32 %v2417, %v2445
        %v2494 = vmul.f32 %v2418, %v2441
        %v2495 = vmul.f32 %v2419, %v2445
        %v2496 = vmul.f32 %v2420, %v2441
        %v2497 = vmul.f32 %v2421, %v2445
        %v2498 = vmul.f32 %v2422, %v2441
        %v2499 = vmul.f32 %v2423, %v2445
        %v2500 = vmul.f32 %v2424, %v2441
        %v2501 = vmul.f32 %v2425, %v2445
        %v2502 = vmul.f32 %v2426, %v2441
        %v2503 = vmul.f32 %v2427, %v2445
        %v2504 = vmul.f32 %v2428, %v2441
        %v2505 = vmul.f32 %v2429, %v2445
        %v2506 = vmul.f32 %v2430, %v2441
        %v2507 = vmul.f32 %v2431, %v2445
        %v2508 = vmul.f32 %v2432, %v2441
        %v2509 = vmul.f32 %v2433, %v2445
        %v2510 = vmul.f32 %v2434, %v2441
        %v2511 = vmul.f32 %v2435, %v2445
        %v2512 = vadd.f32 %v2448, %v2449
        %2513 = vadd.xlane.f32.xlu0 %v2512
        %v2514 = vpop.xlane.xlu0 %2513
        %v2515 = vadd.f32 %v2450, %v2451
        %2516 = vadd.xlane.f32.xlu0 %v2515
        %v2517 = vpop.xlane.xlu0 %2516
        %v2518 = vadd.f32 %v2452, %v2453
        %2519 = vadd.xlane.f32.xlu0 %v2518
        %v2520 = vpop.xlane.xlu0 %2519
        %v2521 = vadd.f32 %v2454, %v2455
        %2522 = vadd.xlane.f32.xlu0 %v2521
        %v2523 = vpop.xlane.xlu0 %2522
        %v2524 = vadd.f32 %v2456, %v2457
        %2525 = vadd.xlane.f32.xlu0 %v2524
        %v2526 = vpop.xlane.xlu0 %2525
        %v2527 = vadd.f32 %v2458, %v2459
        %2528 = vadd.xlane.f32.xlu0 %v2527
        %v2529 = vpop.xlane.xlu0 %2528
        %v2530 = vadd.f32 %v2460, %v2461
        %2531 = vadd.xlane.f32.xlu0 %v2530
        %v2532 = vpop.xlane.xlu0 %2531
        %v2533 = vadd.f32 %v2462, %v2463
        %2534 = vadd.xlane.f32.xlu0 %v2533
        %v2535 = vpop.xlane.xlu0 %2534
        %v2536 = vadd.f32 %v2464, %v2465
        %2537 = vadd.xlane.f32.xlu0 %v2536
        %v2538 = vpop.xlane.xlu0 %2537
        %v2539 = vadd.f32 %v2466, %v2467
        %2540 = vadd.xlane.f32.xlu0 %v2539
        %v2541 = vpop.xlane.xlu0 %2540
        %v2542 = vadd.f32 %v2468, %v2469
        %2543 = vadd.xlane.f32.xlu0 %v2542
        %v2544 = vpop.xlane.xlu0 %2543
        %v2545 = vadd.f32 %v2470, %v2471
        %2546 = vadd.xlane.f32.xlu0 %v2545
        %v2547 = vpop.xlane.xlu0 %2546
        %v2548 = vadd.f32 %v2472, %v2473
        %2549 = vadd.xlane.f32.xlu0 %v2548
        %v2550 = vpop.xlane.xlu0 %2549
        %v2551 = vadd.f32 %v2474, %v2475
        %2552 = vadd.xlane.f32.xlu0 %v2551
        %v2553 = vpop.xlane.xlu0 %2552
        %v2554 = vadd.f32 %v2476, %v2477
        %2555 = vadd.xlane.f32.xlu0 %v2554
        %v2556 = vpop.xlane.xlu0 %2555
        %v2557 = vadd.f32 %v2478, %v2479
        %2558 = vadd.xlane.f32.xlu0 %v2557
        %v2559 = vpop.xlane.xlu0 %2558
        %v2560 = vadd.f32 %v2480, %v2481
        %2561 = vadd.xlane.f32.xlu0 %v2560
        %v2562 = vpop.xlane.xlu0 %2561
        %v2563 = vadd.f32 %v2482, %v2483
        %2564 = vadd.xlane.f32.xlu0 %v2563
        %v2565 = vpop.xlane.xlu0 %2564
        %v2566 = vadd.f32 %v2484, %v2485
        %2567 = vadd.xlane.f32.xlu0 %v2566
        %v2568 = vpop.xlane.xlu0 %2567
        %v2569 = vadd.f32 %v2486, %v2487
        %2570 = vadd.xlane.f32.xlu0 %v2569
        %v2571 = vpop.xlane.xlu0 %2570
        %v2572 = vadd.f32 %v2488, %v2489
        %2573 = vadd.xlane.f32.xlu0 %v2572
        %v2574 = vpop.xlane.xlu0 %2573
        %v2575 = vadd.f32 %v2490, %v2491
        %2576 = vadd.xlane.f32.xlu0 %v2575
        %v2577 = vpop.xlane.xlu0 %2576
        %v2578 = vadd.f32 %v2492, %v2493
        %2579 = vadd.xlane.f32.xlu0 %v2578
        %v2580 = vpop.xlane.xlu0 %2579
        %v2581 = vadd.f32 %v2494, %v2495
        %2582 = vadd.xlane.f32.xlu0 %v2581
        %v2583 = vpop.xlane.xlu0 %2582
        %v2584 = vadd.f32 %v2496, %v2497
        %2585 = vadd.xlane.f32.xlu0 %v2584
        %v2586 = vpop.xlane.xlu0 %2585
        %v2587 = vadd.f32 %v2498, %v2499
        %2588 = vadd.xlane.f32.xlu0 %v2587
        %v2589 = vpop.xlane.xlu0 %2588
        %v2590 = vadd.f32 %v2500, %v2501
        %2591 = vadd.xlane.f32.xlu0 %v2590
        %v2592 = vpop.xlane.xlu0 %2591
        %v2593 = vadd.f32 %v2502, %v2503
        %2594 = vadd.xlane.f32.xlu0 %v2593
        %v2595 = vpop.xlane.xlu0 %2594
        %v2596 = vadd.f32 %v2504, %v2505
        %2597 = vadd.xlane.f32.xlu0 %v2596
        %v2598 = vpop.xlane.xlu0 %2597
        %v2599 = vadd.f32 %v2506, %v2507
        %2600 = vadd.xlane.f32.xlu0 %v2599
        %v2601 = vpop.xlane.xlu0 %2600
        %v2602 = vadd.f32 %v2508, %v2509
        %2603 = vadd.xlane.f32.xlu0 %v2602
        %v2604 = vpop.xlane.xlu0 %2603
        %v2605 = vadd.f32 %v2510, %v2511
        %2606 = vadd.xlane.f32.xlu0 %v2605
        %v2607 = vpop.xlane.xlu0 %2606
        %2608 = vxpose.xlu0.b32.start [1/16] %v2514, 128
        %2609 = vxpose.xlu0.b32.cont [2/16] %v2517, 128
        %2610 = vxpose.xlu0.b32.cont [3/16] %v2520, 128
        %2611 = vxpose.xlu0.b32.cont [4/16] %v2523, 128
        %2612 = vxpose.xlu0.b32.cont [5/16] %v2526, 128
        %2613 = vxpose.xlu0.b32.cont [6/16] %v2529, 128
        %2614 = vxpose.xlu0.b32.cont [7/16] %v2532, 128
        %2615 = vxpose.xlu0.b32.cont [8/16] %v2535, 128
        %2616 = vxpose.xlu0.b32.cont [9/16] %v2538, 128
        %2617 = vxpose.xlu0.b32.cont [10/16] %v2541, 128
        %2618 = vxpose.xlu0.b32.cont [11/16] %v2544, 128
        %2619 = vxpose.xlu0.b32.cont [12/16] %v2547, 128
        %2620 = vxpose.xlu0.b32.cont [13/16] %v2550, 128
        %2621 = vxpose.xlu0.b32.cont [14/16] %v2553, 128
        %2622 = vxpose.xlu0.b32.cont [15/16] %v2556, 128
        %2623 = vxpose.xlu0.b32.end [16/16] %v2559, 128
        %v2624 = vpop.trf.xlu0
        %v2625 = vpop.trf.xlu0
        %v2626 = vpop.trf.xlu0
        %v2627 = vpop.trf.xlu0
        %v2628 = vpop.trf.xlu0
        %v2629 = vpop.trf.xlu0
        %v2630 = vpop.trf.xlu0
        %v2631 = vpop.trf.xlu0
        %v2632 = vpop.trf.xlu0
        %v2633 = vpop.trf.xlu0
        %v2634 = vpop.trf.xlu0
        %v2635 = vpop.trf.xlu0
        %v2636 = vpop.trf.xlu0
        %v2637 = vpop.trf.xlu0
        %v2638 = vpop.trf.xlu0
        %v2639 = vpop.trf.xlu0
        %2640 = vxpose.xlu0.b32.start [1/16] %v2562, 128
        %2641 = vxpose.xlu0.b32.cont [2/16] %v2565, 128
        %2642 = vxpose.xlu0.b32.cont [3/16] %v2568, 128
        %2643 = vxpose.xlu0.b32.cont [4/16] %v2571, 128
        %2644 = vxpose.xlu0.b32.cont [5/16] %v2574, 128
        %2645 = vxpose.xlu0.b32.cont [6/16] %v2577, 128
        %2646 = vxpose.xlu0.b32.cont [7/16] %v2580, 128
        %2647 = vxpose.xlu0.b32.cont [8/16] %v2583, 128
        %2648 = vxpose.xlu0.b32.cont [9/16] %v2586, 128
        %2649 = vxpose.xlu0.b32.cont [10/16] %v2589, 128
        %2650 = vxpose.xlu0.b32.cont [11/16] %v2592, 128
        %2651 = vxpose.xlu0.b32.cont [12/16] %v2595, 128
        %2652 = vxpose.xlu0.b32.cont [13/16] %v2598, 128
        %2653 = vxpose.xlu0.b32.cont [14/16] %v2601, 128
        %2654 = vxpose.xlu0.b32.cont [15/16] %v2604, 128
        %2655 = vxpose.xlu0.b32.end [16/16] %v2607, 128
        %v2656 = vpop.trf.xlu0
        %v2657 = vpop.trf.xlu0
        %v2658 = vpop.trf.xlu0
        %v2659 = vpop.trf.xlu0
        %v2660 = vpop.trf.xlu0
        %v2661 = vpop.trf.xlu0
        %v2662 = vpop.trf.xlu0
        %v2663 = vpop.trf.xlu0
        %v2664 = vpop.trf.xlu0
        %v2665 = vpop.trf.xlu0
        %v2666 = vpop.trf.xlu0
        %v2667 = vpop.trf.xlu0
        %v2668 = vpop.trf.xlu0
        %v2669 = vpop.trf.xlu0
        %v2670 = vpop.trf.xlu0
        %v2671 = vpop.trf.xlu0
        %v2672 = vld [vmem:[#allocation2] sm:$0x1]
        %2674 = vset.pattern.permute.xlu0 0
        %2675 = vperm.xlu0 %2674, %v2672
        %v2676 = vpop.permute.xlu0 %2675
        %v2678 = vlaneseq
        %v2679 = vshrl.u32 %v2678, 7
        %v2680 = vsub.s32 0, %v2679
        %v2681 = vrot.slane %v2676, %v2680
        %v2682 = vadd.f32 %v2624, %v2681
        %v2683 = vadd.f32 %v2656, %v2681
        %v2684 = vxor.u32 %v2682, 2147483648
        %v2685 = vxor.u32 %v2683, 2147483648
        %v2686 = vmul.f32 %v2684, 1.442695
        %v2687 = vpow.pop %v2686
        %v2688 = vmul.f32 %v2685, 1.442695
        %v2689 = vpow.pop %v2688
        %v2690 = vadd.f32 %v2687, 1.0
        %v2691 = vadd.f32 %v2689, 1.0
        %v2692 = vrcp.pop %v2690
        %v2693 = vmul.f32 1.0, %v2692
        %v2694 = vrcp.pop %v2691
        %v2695 = vmul.f32 1.0, %v2694
        %v2698 = vcombine.low %v2693, %v2695
        %v2700 = vunpack.c.l.s4 1966171168
        %v2701 = vunpack.c.0.s8 %v2700
        %v2702 = vlaneseq
        %v2703 = vshrl.u32 %v2702, 7
        %v2704 = vsub.s32 %v2701, %v2703
        %v2705 = vrot.slane %v2698, %v2704
        %v2707 = vunpack.c.l.s4 1966171168
        %v2708 = vunpack.c.0.s8 %v2707
        %v2709 = vlaneseq
        %v2710 = vshrl.u32 %v2709, 7
        %v2711 = vsub.s32 %v2708, %v2710
        %v2712 = vrot.slane %v2705, %v2711
        %v2714 = vlaneseq
        %vm2715 = vcmp.ge.s32.totalorder %v2714, 0
        %vm2716 = vcmp.lt.s32.totalorder %v2714, 256
        %vm2717 = vmand %vm2715, %vm2716
        %2718 = vst.msk [vmem:[%s404] sm:$0x3] %vm2717, %v2712
        %s2719 = sand.u32 %s232, 1
        %s2720 = scalar_lea.sflag [#allocation5], %s2719
        %s2721 = sand.u32 %s232, 1
        %s2722 = smul.addr %s2721, 2
        %s2723 = scalar_lea.vmem [#allocation11], %s2722
        // Predicated region
        $region73: #{tpu_custom_call.1} parent=55 // pred_check
          %p2724 = pneg %p242
        $region74: #{tpu_custom_call.1} parent=55 // pred_check_branch
          %2726 = sbr.rel (%p2724) target = $region76
        $region75: #{tpu_custom_call.1} parent=55 // pred_region
          %s2727 = smul.u32 2, %s30
          %s2729 = ssub.s32 32, 32
          %2730 = vsyncadd %s2720, %s2729
          %s2731 = smul.addr %s2727, 16
          %s2732 = scalar_lea.hbm %s9, %s2731
          %s2734 = sshll.u32 %s2723, 4
          %s2735 = int_to_ptr.vmem [resolvable:$true] %s2734
          %2737 = dma.vmem_to_hbm [thread:$0]  %s2735, 32, %s2732, %s2720
        $region76: #{tpu_custom_call.1} parent=55 // pred_fallthru
          _
      $region56: #{tpu_custom_call.1} parent=5 // pred_fallthru
        _
      %p2738 = scmp.le.s32.totalorder 2, %s25
      // Predicated region
      $region77: #{tpu_custom_call.1} parent=5 // pred_check
        %p2739 = pneg %p2738
      $region78: #{tpu_custom_call.1} parent=5 // pred_check_branch
        %2741 = sbr.rel (%p2739) target = $region80
      $region79: #{tpu_custom_call.1} parent=5 // pred_region
        %s2742 = ssub.s32 %s25, 2
        // Predicated region
        $region81: #{tpu_custom_call.1} parent=79 // pred_check
          %p2743 = pneg %p248
        $region82: #{tpu_custom_call.1} parent=79 // pred_check_branch
          %2745 = sbr.rel (%p2743) target = $region84
        $region83: #{tpu_custom_call.1} parent=79 // pred_region
          %s2746 = sand.u32 %s233, 1
          %s2747 = scalar_lea.sflag [#allocation5], %s2746
          %s2748 = sand.u32 %s233, 1
          %s2749 = smul.addr %s2748, 2
          %s2750 = scalar_lea.vmem [#allocation11], %s2749
          %2751 = dma.done %s2747, 32
        $region84: #{tpu_custom_call.1} parent=79 // pred_fallthru
          _
      $region80: #{tpu_custom_call.1} parent=5 // pred_fallthru
        _
    $region6: #{tpu_custom_call.1} parent=1 // loop_footer
      %s29 = sadd.s32 1, %s25
    $region7: #{tpu_custom_call.1} parent=1 // loop_footer_branch
      %24 = sbr.rel target = $region3
    $region8: #{tpu_custom_call.1} parent=1 // loop_exit
      _
    %2752 = vsyncpa [#allocation4], 1
    %s2753 = scalar_lea.sflag [#allocation4], 1
    %2754 = vsyncpa %s2753, 1
    %2755 = vsyncpa [#allocation7], 1
    %2756 = vsyncpa [#allocation10], 1
    %2757 = vsyncpa [#allocation5], 1
    %s2758 = scalar_lea.sflag [#allocation5], 1
    %2759 = vsyncpa %s2758, 1

</llo_original>
